<compile_context>
chip_gen: v7x
topology: tpu7x:2x2x1
jax: 0.10.0
libtpu: 0.0.40
codegen_flags: <defaults>
</compile_context>

<pallas_src>
import jax
import jax.numpy as jnp
from jax import lax
from jax.experimental import pallas as pl
from jax.experimental.pallas import tpu as pltpu


# ------------------------------ helpers -------------------------------------

def _round_up(v, m):
    return (v + m - 1) // m * m


def _pad2d(a, rows, cols):
    r, c = a.shape
    return jnp.pad(a, ((0, rows - r), (0, cols - c)))


def _block_remap_rows(w, widths, out_cols):
    """Row-remap w (rows = concat of `widths` groups) into 128-padded block layout."""
    parts, r = [], 0
    for wd in widths:
        parts.append(_pad2d(w[r:r + wd], _round_up(wd, 128), out_cols))
        r += wd
    return jnp.concatenate(parts, axis=0)


def _vmem_specs(n):
    return [pl.BlockSpec(memory_space=pltpu.MemorySpace.VMEM)] * n


def _vmem_limit_bytes():
    # ~100 MiB on v5e/v6e (128 MiB physical), ~56 MiB on v7x (64 MiB physical).
    try:
        cap = int(pltpu.get_tpu_info().vmem_capacity_bytes)
    except Exception:
        return 64 * 1024 * 1024
    return int(min(cap * 7 // 8, 100 * 1024 * 1024))


# --------------------------- fused Pallas kernel -----------------------------

def _make_fused_kernel(num_layers, part_pads, fcp, has_final):
    """Fused forward: GCN stack -> concat -> global_add_pool -> GAT -> fc [-> fc_final]."""
    offsets, off = [], 0
    for p in part_pads:
        offsets.append(off)
        off += p
    cat_pad = off

    def kernel(*refs):
        a_ref, x0_ref = refs[0], refs[1]
        conv_refs = refs[2:2 + 2 * num_layers]
        base = 2 + 2 * num_layers
        (pool_ref, wgf_ref, asrc_ref, adst_ref, bg_ref,
         mask_ref, wf2_ref, bf_ref) = refs[base:base + 8]
        base += 8
        if has_final:
            fx_ref, wff1_ref, wff2_ref, bff_ref = refs[base:base + 4]
            base += 4
        out_ref, hcat_ref = refs[base], refs[base + 1]

        bf16, f32 = jnp.bfloat16, jnp.float32
        a_bf = a_ref[...]                              # bf16 normalized adjacency

        # ---- GCN stack (GCNConv(...).tanh()); every stage lands in the concat scratch ----
        h_bf = x0_ref[...]                             # bf16 [N_pad, part_pads[0]]
        hcat_ref[:, 0:part_pads[0]] = h_bf
        for l in range(num_layers):
            w_ref, b_ref = conv_refs[2 * l], conv_refs[2 * l + 1]
            xw = jnp.dot(h_bf, w_ref[...], preferred_element_type=f32)
            h = jnp.tanh(jnp.dot(a_bf, xw.astype(bf16),
                                 preferred_element_type=f32) + b_ref[...])
            h_bf = h.astype(bf16)                      # single cast per layer
            c0 = offsets[l + 1]
            hcat_ref[:, c0:c0 + part_pads[l + 1]] = h_bf
        # insurance: every column of the scratch is written before the full read
        assert offsets[-1] + part_pads[-1] == cat_pad
        # TODO(synk): nn.Dropout is identity at inference; training-mode random
        # masking is not implemented.

        # ---- ONE wide global_add_pool matmul over the whole concatenation ----
        pooled_bf = jnp.dot(pool_ref[...], hcat_ref[...],
                            preferred_element_type=f32).astype(bf16)   # [G_pad, cat_pad]

        # ---- fused (GAT lin | fc pooled-half) matmul ----
        big = jnp.dot(pooled_bf, wgf_ref[...], preferred_element_type=f32)  # [G_pad, 2*fcp]
        h_g = big[:, 0:fcp]
        fc_pooled = big[:, fcp:2 * fcp]
        h_g_bf = h_g.astype(bf16)

        # ---- single-head GATConv (+ tanh) over the call graph ----
        # TODO(synk): review suggests a VPU reduce + [G,1]->[1,G] transpose for the
        # source score; keep the proven M=1 transposed-rhs matvec (negligible cost,
        # avoids a small-shape relayout lowering risk).
        a_src_row = lax.dot_general(asrc_ref[...].astype(bf16), h_g_bf,
                                    (((1,), (1,)), ((), ())),
                                    preferred_element_type=f32)             # [1, G_pad]
        a_dst_col = jnp.sum(h_g * adst_ref[...], axis=-1, keepdims=True)    # [G_pad, 1]
        e = a_dst_col + a_src_row                                           # e[tgt, src]
        e = jnp.where(e >= 0.0, e, 0.2 * e)                                 # LeakyReLU(0.2)
        e = jnp.where(mask_ref[...] > 0.0, e, jnp.float32(-1e30))           # single mask pass
        e = e - jnp.max(e, axis=-1, keepdims=True)
        p = jnp.exp(e)                                 # non-edges underflow to exactly 0
        alpha = p / jnp.sum(p, axis=-1, keepdims=True)                      # exact softmax
        h_ctx = jnp.tanh(jnp.dot(alpha.astype(bf16), h_g_bf,
                                 preferred_element_type=f32) + bg_ref[...])

        # ---- fc([pooled, h_ctx]) via split weights (no concat needed) ----
        fc_out = fc_pooled + jnp.dot(h_ctx.astype(bf16), wf2_ref[...],
                                     preferred_element_type=f32) + bf_ref[...]

        if has_final:
            # fc_final([fc_out, func_pcode_x]) fused as two block matmuls
            out_ref[...] = (jnp.dot(fc_out.astype(bf16), wff1_ref[...],
                                    preferred_element_type=f32)
                            + jnp.dot(fx_ref[...], wff2_ref[...],
                                      preferred_element_type=f32)
                            + bff_ref[...])
        else:
            out_ref[...] = fc_out

        # TODO(synk): for large N/G, add a grid over node-row tiles of A
        # (dimension_semantics=("parallel",) for the v7x second TensorCore) and a
        # sparse CSR + segment-sum message-passing path instead of the dense
        # N x N adjacency matmul.

    return kernel


# ------------------------------ params & prep --------------------------------

def init_params(key, num_layers, layer_spec, initial_dim, pcode2vec='None'):
    dims = [int(d) for d in layer_spec.split(',')]
    assert len(dims) == num_layers
    num_features_bb = initial_dim + 12 if 'bb' in pcode2vec else 12
    num_features_func = initial_dim if 'func' in pcode2vec else 0
    fc_dim = sum(dims) + num_features_bb
    keys = iter(jax.random.split(key, 2 * num_layers + 12))

    def dense(k, shape):
        fan_in = max(shape[0], 1)
        s = 1.0 / jnp.sqrt(jnp.float32(fan_in))
        return jax.random.uniform(k, shape, jnp.float32, -1.0, 1.0) * s

    convs, in_dim = [], num_features_bb
    for out_dim in dims:
        convs.append((dense(next(keys), (in_dim, out_dim)),
                      dense(next(keys), (1, out_dim))))
        in_dim = out_dim

    gat = (dense(next(keys), (fc_dim, fc_dim)),      # lin weight (stored [in, out])
           dense(next(keys), (1, fc_dim)),           # att_src
           dense(next(keys), (1, fc_dim)),           # att_dst
           dense(next(keys), (1, fc_dim)))           # bias
    fc = (dense(next(keys), (2 * fc_dim, fc_dim)), dense(next(keys), (1, fc_dim)))
    fc_final = (dense(next(keys), (fc_dim + num_features_func, fc_dim)),
                dense(next(keys), (1, fc_dim)))
    return dict(convs=convs, gat=gat, fc=fc, fc_final=fc_final, dims=dims,
                fc_dim=fc_dim, num_features_bb=num_features_bb,
                num_features_func=num_features_func)


def prepare_padded_params(params):
    """Hoist all static weight padding / block-remapping / bf16 casts to init time."""
    dims = params['dims']
    nfb = params['num_features_bb']
    nff = params['num_features_func']
    fc_dim = params['fc_dim']
    widths = [nfb] + dims
    part_pads = [_round_up(w, 128) for w in widths]
    cat_pad = sum(part_pads)
    fcp = _round_up(fc_dim, 128)

    conv_args = []
    for (w, b), wi, wo in zip(params['convs'], widths[:-1], widths[1:]):
        conv_args.append(_pad2d(w, _round_up(wi, 128),
                                _round_up(wo, 128)).astype(jnp.bfloat16))
        conv_args.append(_pad2d(b, 1, _round_up(wo, 128)))

    gat_w, att_src, att_dst, gat_b = params['gat']
    wg = _block_remap_rows(gat_w, widths, fcp)                      # [cat_pad, fcp]
    fc_w, fc_b = params['fc']
    wf1 = _block_remap_rows(fc_w[:fc_dim], widths, fcp)             # [cat_pad, fcp]
    # column-fuse (GAT lin | fc pooled-half) -> one wide MXU matmul in the kernel
    wgf = jnp.concatenate([wg, wf1], axis=1).astype(jnp.bfloat16)   # [cat_pad, 2*fcp]
    wf2 = _pad2d(fc_w[fc_dim:], fcp, fcp).astype(jnp.bfloat16)

    prepared = dict(
        dims=dims, num_features_bb=nfb, num_features_func=nff, fc_dim=fc_dim,
        widths=widths, part_pads=part_pads, cat_pad=cat_pad, fcp=fcp,
        conv_args=conv_args, wgf=wgf,
        asrc=_pad2d(att_src, 1, fcp), adst=_pad2d(att_dst, 1, fcp),
        bg=_pad2d(gat_b, 1, fcp), wf2=wf2, bf=_pad2d(fc_b, 1, fcp))

    if nff > 0:
        ff_w, ff_b = params['fc_final']
        nffp = _round_up(nff, 128)
        prepared.update(
            nff_pad=nffp,
            wff1=_pad2d(ff_w[:fc_dim], fcp, fcp).astype(jnp.bfloat16),
            wff2=_pad2d(ff_w[fc_dim:], nffp, fcp).astype(jnp.bfloat16),
            bff=_pad2d(ff_b, 1, fcp))
    return prepared


# ------------------------------ JAX glue -------------------------------------

def dense_gcn_norm(edge_index, num_nodes):
    # Dense equivalent of PyG gcn_norm with add_self_loops=True, edge_weight=1.
    src, dst = edge_index[0], edge_index[1]
    a = jnp.zeros((num_nodes, num_nodes), jnp.float32).at[dst, src].add(1.0)
    a = a + jnp.eye(num_nodes, dtype=jnp.float32)                 # self loops
    deg = jnp.sum(a, axis=1)
    dinv = jnp.where(deg > 0, lax.rsqrt(deg), 0.0)
    return dinv[:, None] * a * dinv[None, :]


def dense_gat_adj(edge_index, g_pad):
    # 0/1 mask[i, j] = 1 iff edge j -> i (plus self loops) for the masked softmax.
    src, dst = edge_index[0], edge_index[1]
    m = jnp.zeros((g_pad, g_pad), jnp.float32).at[dst, src].set(1.0)
    return jnp.maximum(m, jnp.eye(g_pad, dtype=jnp.float32))


def cfg2vec_gog_forward(prepared, x, edge_index, batch, edge_index_cg,
                        num_graphs, func_pcode_x=None):
    num_layers = len(prepared['dims'])
    fc_dim, fcp = prepared['fc_dim'], prepared['fcp']
    part_pads, cat_pad = prepared['part_pads'], prepared['cat_pad']

    n = x.shape[0]
    # bf16 packs 16 rows per vreg -> pad row counts to 16 (no half-masked sublanes)
    n_pad = _round_up(max(n, 16), 16)
    g_pad = _round_up(max(num_graphs, 16), 16)

    a_pad = _pad2d(dense_gcn_norm(edge_index, n), n_pad, n_pad).astype(jnp.bfloat16)
    mask = dense_gat_adj(edge_index_cg, g_pad)                                   # f32
    pool_pad = _pad2d(jax.nn.one_hot(batch, g_pad, dtype=jnp.float32).T,
                      g_pad, n_pad).astype(jnp.bfloat16)                         # [G_pad, N_pad]
    x0 = _pad2d(x.astype(jnp.float32), n_pad, part_pads[0]).astype(jnp.bfloat16)

    has_final = func_pcode_x is not None
    args = [a_pad, x0, *prepared['conv_args'], pool_pad, prepared['wgf'],
            prepared['asrc'], prepared['adst'], prepared['bg'], mask,
            prepared['wf2'], prepared['bf']]
    if has_final:
        assert prepared['num_features_func'] > 0
        fx = _pad2d(func_pcode_x.astype(jnp.float32), g_pad,
                    prepared['nff_pad']).astype(jnp.bfloat16)
        args += [fx, prepared['wff1'], prepared['wff2'], prepared['bff']]

    kernel = _make_fused_kernel(num_layers, part_pads, fcp, has_final)
    out_pad = pl.pallas_call(
        kernel,
        out_shape=jax.ShapeDtypeStruct((g_pad, fcp), jnp.float32),
        in_specs=_vmem_specs(len(args)),
        out_specs=pl.BlockSpec(memory_space=pltpu.MemorySpace.VMEM),
        scratch_shapes=[pltpu.VMEM((n_pad, cat_pad), jnp.bfloat16)],
        compiler_params=pltpu.CompilerParams(vmem_limit_bytes=_vmem_limit_bytes()),
    )(*args)

    return out_pad[:num_graphs, :fc_dim]


# --------------------------------- demo --------------------------------------

if __name__ == "__main__":
    key = jax.random.PRNGKey(0)
    k_p1, k_p2, k_src, k_dst, k_x1, k_x2, k_fx = jax.random.split(key, 7)

    N, G, E = 16, 4, 32                              # basic blocks / functions / bb edges
    src = jax.random.randint(k_src, (E,), 0, N, dtype=jnp.int32)
    dst = jax.random.randint(k_dst, (E,), 0, N, dtype=jnp.int32)
    edge_index = jnp.stack([src, dst])                                   # [2, E]
    batch = jnp.repeat(jnp.arange(G, dtype=jnp.int32), N // G)           # [N]
    edge_index_cg = jnp.array([[0, 1, 2, 3, 0, 1],
                               [1, 2, 3, 0, 2, 3]], dtype=jnp.int32)     # [2, 6]

    # config 1: pcode2vec='None' -> 12 bb features, no func features (no fc_final)
    params1 = init_params(k_p1, num_layers=2, layer_spec="32,32",
                          initial_dim=32, pcode2vec='None')
    prep1 = prepare_padded_params(params1)
    x1 = jax.random.normal(k_x1, (N, params1['num_features_bb']), jnp.float32)
    out1 = cfg2vec_gog_forward(prep1, x1, edge_index, batch, edge_index_cg,
                               num_graphs=G, func_pcode_x=None)
    jax.block_until_ready(out1)
    assert out1.shape == (G, params1['fc_dim'])
    assert bool(jnp.all(jnp.isfinite(out1)))

    # config 2: pcode2vec='bb_func' -> fc_final fused into the same kernel
    params2 = init_params(k_p2, num_layers=2, layer_spec="32,32",
                          initial_dim=32, pcode2vec='bb_func')
    prep2 = prepare_padded_params(params2)
    x2 = jax.random.normal(k_x2, (N, params2['num_features_bb']), jnp.float32)
    fx = jax.random.normal(k_fx, (G, params2['num_features_func']), jnp.float32)
    out2 = cfg2vec_gog_forward(prep2, x2, edge_index, batch, edge_index_cg,
                               num_graphs=G, func_pcode_x=fx)
    jax.block_until_ready(out2)
    assert out2.shape == (G, params2['fc_dim'])
    assert bool(jnp.all(jnp.isfinite(out2)))

    print("KERNEL_OK")
</pallas_src>

<mosaic_0001>
module attributes {stable_mosaic.version = 11 : i64} {
  func.func @kernel(%arg0: memref<16x16xbf16, #tpu.memory_space<vmem>>, %arg1: memref<16x128xbf16, #tpu.memory_space<vmem>>, %arg2: memref<128x128xbf16, #tpu.memory_space<vmem>>, %arg3: memref<1x128xf32, #tpu.memory_space<vmem>>, %arg4: memref<128x128xbf16, #tpu.memory_space<vmem>>, %arg5: memref<1x128xf32, #tpu.memory_space<vmem>>, %arg6: memref<16x16xbf16, #tpu.memory_space<vmem>>, %arg7: memref<384x256xbf16, #tpu.memory_space<vmem>>, %arg8: memref<1x128xf32, #tpu.memory_space<vmem>>, %arg9: memref<1x128xf32, #tpu.memory_space<vmem>>, %arg10: memref<1x128xf32, #tpu.memory_space<vmem>>, %arg11: memref<16x16xf32, #tpu.memory_space<vmem>>, %arg12: memref<128x128xbf16, #tpu.memory_space<vmem>>, %arg13: memref<1x128xf32, #tpu.memory_space<vmem>>, %arg14: memref<16x128xf32, #tpu.memory_space<vmem>>, %arg15: memref<16x384xbf16, #tpu.memory_space<vmem>>) attributes {dimension_semantics = [], scalar_prefetch = 0 : i64, scratch_operands = 1 : i64, tpu.core_type = #tpu.core_type<tc>} {
    %c0 = arith.constant 0 : index
    %c0_0 = arith.constant 0 : index
    %0 = vector.load %arg0[%c0, %c0_0] : memref<16x16xbf16, #tpu.memory_space<vmem>>, vector<16x16xbf16>
    %c0_1 = arith.constant 0 : index
    %c0_2 = arith.constant 0 : index
    %1 = vector.load %arg1[%c0_1, %c0_2] : memref<16x128xbf16, #tpu.memory_space<vmem>>, vector<16x128xbf16>
    %c0_3 = arith.constant 0 : index
    %c0_4 = arith.constant 0 : index
    %2 = vector.load %arg15[%c0_3, %c0_4] : memref<16x384xbf16, #tpu.memory_space<vmem>>, vector<16x128xbf16>
    tpu.vector_store %arg15[%c0_3, %c0_4], %1 {strides = array<i32>} : memref<16x384xbf16, #tpu.memory_space<vmem>>, vector<16x128xbf16>,
    %c0_5 = arith.constant 0 : index
    %c0_6 = arith.constant 0 : index
    %3 = vector.load %arg2[%c0_5, %c0_6] : memref<128x128xbf16, #tpu.memory_space<vmem>>, vector<128x128xbf16>
    %cst = arith.constant dense<0.000000e+00> : vector<16x128xf32>
    %4 = tpu.matmul %1, %3, %cst {dimension_numbers = #tpu.dot_dimension_numbers<[1], [0], [0], [1], [0, 0, 1, 1], [], []>} : vector<16x128xbf16>, vector<128x128xbf16>, vector<16x128xf32> -> vector<16x128xf32>
    %5 = arith.truncf %4 : vector<16x128xf32> to vector<16x128xbf16>
    %cst_7 = arith.constant dense<0.000000e+00> : vector<16x128xf32>
    %6 = tpu.matmul %0, %5, %cst_7 {dimension_numbers = #tpu.dot_dimension_numbers<[1], [0], [0], [1], [0, 0, 1, 1], [], []>} : vector<16x16xbf16>, vector<16x128xbf16>, vector<16x128xf32> -> vector<16x128xf32>
    %c0_8 = arith.constant 0 : index
    %c0_9 = arith.constant 0 : index
    %7 = vector.load %arg3[%c0_8, %c0_9] : memref<1x128xf32, #tpu.memory_space<vmem>>, vector<1x128xf32>
    %8 = vector.broadcast %7 : vector<1x128xf32> to vector<16x128xf32>
    %9 = arith.addf %6, %8 : vector<16x128xf32>
    %10 = math.tanh %9 : vector<16x128xf32>
    %11 = arith.truncf %10 : vector<16x128xf32> to vector<16x128xbf16>
    %c0_10 = arith.constant 0 : index
    %c128 = arith.constant 128 : index
    %12 = vector.load %arg15[%c0_10, %c128] : memref<16x384xbf16, #tpu.memory_space<vmem>>, vector<16x128xbf16>
    tpu.vector_store %arg15[%c0_10, %c128], %11 {strides = array<i32>} : memref<16x384xbf16, #tpu.memory_space<vmem>>, vector<16x128xbf16>,
    %c0_11 = arith.constant 0 : index
    %c0_12 = arith.constant 0 : index
    %13 = vector.load %arg4[%c0_11, %c0_12] : memref<128x128xbf16, #tpu.memory_space<vmem>>, vector<128x128xbf16>
    %cst_13 = arith.constant dense<0.000000e+00> : vector<16x128xf32>
    %14 = tpu.matmul %11, %13, %cst_13 {dimension_numbers = #tpu.dot_dimension_numbers<[1], [0], [0], [1], [0, 0, 1, 1], [], []>} : vector<16x128xbf16>, vector<128x128xbf16>, vector<16x128xf32> -> vector<16x128xf32>
    %15 = arith.truncf %14 : vector<16x128xf32> to vector<16x128xbf16>
    %cst_14 = arith.constant dense<0.000000e+00> : vector<16x128xf32>
    %16 = tpu.matmul %0, %15, %cst_14 {dimension_numbers = #tpu.dot_dimension_numbers<[1], [0], [0], [1], [0, 0, 1, 1], [], []>} : vector<16x16xbf16>, vector<16x128xbf16>, vector<16x128xf32> -> vector<16x128xf32>
    %c0_15 = arith.constant 0 : index
    %c0_16 = arith.constant 0 : index
    %17 = vector.load %arg5[%c0_15, %c0_16] : memref<1x128xf32, #tpu.memory_space<vmem>>, vector<1x128xf32>
    %18 = vector.broadcast %17 : vector<1x128xf32> to vector<16x128xf32>
    %19 = arith.addf %16, %18 : vector<16x128xf32>
    %20 = math.tanh %19 : vector<16x128xf32>
    %21 = arith.truncf %20 : vector<16x128xf32> to vector<16x128xbf16>
    %c0_17 = arith.constant 0 : index
    %c256 = arith.constant 256 : index
    %22 = vector.load %arg15[%c0_17, %c256] : memref<16x384xbf16, #tpu.memory_space<vmem>>, vector<16x128xbf16>
    tpu.vector_store %arg15[%c0_17, %c256], %21 {strides = array<i32>} : memref<16x384xbf16, #tpu.memory_space<vmem>>, vector<16x128xbf16>,
    %c0_18 = arith.constant 0 : index
    %c0_19 = arith.constant 0 : index
    %23 = vector.load %arg6[%c0_18, %c0_19] : memref<16x16xbf16, #tpu.memory_space<vmem>>, vector<16x16xbf16>
    %c0_20 = arith.constant 0 : index
    %c0_21 = arith.constant 0 : index
    %24 = vector.load %arg15[%c0_20, %c0_21] : memref<16x384xbf16, #tpu.memory_space<vmem>>, vector<16x384xbf16>
    %cst_22 = arith.constant dense<0.000000e+00> : vector<16x384xf32>
    %25 = tpu.matmul %23, %24, %cst_22 {dimension_numbers = #tpu.dot_dimension_numbers<[1], [0], [0], [1], [0, 0, 1, 1], [], []>} : vector<16x16xbf16>, vector<16x384xbf16>, vector<16x384xf32> -> vector<16x384xf32>
    %26 = arith.truncf %25 : vector<16x384xf32> to vector<16x384xbf16>
    %c0_23 = arith.constant 0 : index
    %c0_24 = arith.constant 0 : index
    %27 = vector.load %arg7[%c0_23, %c0_24] : memref<384x256xbf16, #tpu.memory_space<vmem>>, vector<384x256xbf16>
    %cst_25 = arith.constant dense<0.000000e+00> : vector<16x256xf32>
    %28 = tpu.matmul %26, %27, %cst_25 {dimension_numbers = #tpu.dot_dimension_numbers<[1], [0], [0], [1], [0, 0, 1, 1], [], []>} : vector<16x384xbf16>, vector<384x256xbf16>, vector<16x256xf32> -> vector<16x256xf32>
    %29 = vector.extract_strided_slice %28 {offsets = [0, 0], sizes = [16, 128], strides = [1, 1]} : vector<16x256xf32> to vector<16x128xf32>
    %30 = vector.extract_strided_slice %28 {offsets = [0, 128], sizes = [16, 128], strides = [1, 1]} : vector<16x256xf32> to vector<16x128xf32>
    %31 = arith.truncf %29 : vector<16x128xf32> to vector<16x128xbf16>
    %c0_26 = arith.constant 0 : index
    %c0_27 = arith.constant 0 : index
    %32 = vector.load %arg8[%c0_26, %c0_27] : memref<1x128xf32, #tpu.memory_space<vmem>>, vector<1x128xf32>
    %33 = arith.truncf %32 : vector<1x128xf32> to vector<1x128xbf16>
    %cst_28 = arith.constant dense<0.000000e+00> : vector<1x16xf32>
    %34 = tpu.matmul %33, %31, %cst_28 {dimension_numbers = #tpu.dot_dimension_numbers<[1], [1], [0], [0], [0, 0, 1, 0], [], []>} : vector<1x128xbf16>, vector<16x128xbf16>, vector<1x16xf32> -> vector<1x16xf32>
    %c0_29 = arith.constant 0 : index
    %c0_30 = arith.constant 0 : index
    %35 = vector.load %arg9[%c0_29, %c0_30] : memref<1x128xf32, #tpu.memory_space<vmem>>, vector<1x128xf32>
    %36 = vector.broadcast %35 : vector<1x128xf32> to vector<16x128xf32>
    %37 = arith.mulf %29, %36 : vector<16x128xf32>
    %cst_31 = arith.constant dense<0.000000e+00> : vector<16xf32>
    %38 = vector.multi_reduction <add>, %37, %cst_31 [1] : vector<16x128xf32> to vector<16xf32>
    %39 = vector.shape_cast %38 : vector<16xf32> to vector<16x1xf32>
    %40 = vector.broadcast %39 : vector<16x1xf32> to vector<16x16xf32>
    %41 = vector.broadcast %34 : vector<1x16xf32> to vector<16x16xf32>
    %42 = arith.addf %40, %41 : vector<16x16xf32>
    %cst_32 = arith.constant 0.000000e+00 : f32
    %43 = vector.broadcast %cst_32 : f32 to vector<16x16xf32>
    %44 = arith.cmpf oge, %42, %43 : vector<16x16xf32>
    %cst_33 = arith.constant 2.000000e-01 : f32
    %45 = vector.broadcast %cst_33 : f32 to vector<16x16xf32>
    %46 = arith.mulf %45, %42 : vector<16x16xf32>
    %47 = arith.select %44, %42, %46 : vector<16x16xi1>, vector<16x16xf32>
    %c0_34 = arith.constant 0 : index
    %c0_35 = arith.constant 0 : index
    %48 = vector.load %arg11[%c0_34, %c0_35] : memref<16x16xf32, #tpu.memory_space<vmem>>, vector<16x16xf32>
    %cst_36 = arith.constant 0.000000e+00 : f32
    %49 = vector.broadcast %cst_36 : f32 to vector<16x16xf32>
    %50 = arith.cmpf ogt, %48, %49 : vector<16x16xf32>
    %cst_37 = arith.constant -1.000000e+30 : f32
    %51 = vector.broadcast %cst_37 : f32 to vector<16x16xf32>
    %52 = arith.select %50, %47, %51 : vector<16x16xi1>, vector<16x16xf32>
    %cst_38 = arith.constant dense<0xFF800000> : vector<16xf32>
    %53 = vector.multi_reduction <maximumf>, %52, %cst_38 [1] : vector<16x16xf32> to vector<16xf32>
    %54 = vector.shape_cast %53 : vector<16xf32> to vector<16x1xf32>
    %55 = vector.broadcast %54 : vector<16x1xf32> to vector<16x16xf32>
    %56 = arith.subf %52, %55 : vector<16x16xf32>
    %57 = math.exp %56 : vector<16x16xf32>
    %cst_39 = arith.constant dense<0.000000e+00> : vector<16xf32>
    %58 = vector.multi_reduction <add>, %57, %cst_39 [1] : vector<16x16xf32> to vector<16xf32>
    %59 = vector.shape_cast %58 : vector<16xf32> to vector<16x1xf32>
    %60 = vector.broadcast %59 : vector<16x1xf32> to vector<16x16xf32>
    %61 = arith.divf %57, %60 : vector<16x16xf32>
    %62 = arith.truncf %61 : vector<16x16xf32> to vector<16x16xbf16>
    %cst_40 = arith.constant dense<0.000000e+00> : vector<16x128xf32>
    %63 = tpu.matmul %62, %31, %cst_40 {dimension_numbers = #tpu.dot_dimension_numbers<[1], [0], [0], [1], [0, 0, 1, 1], [], []>} : vector<16x16xbf16>, vector<16x128xbf16>, vector<16x128xf32> -> vector<16x128xf32>
    %c0_41 = arith.constant 0 : index
    %c0_42 = arith.constant 0 : index
    %64 = vector.load %arg10[%c0_41, %c0_42] : memref<1x128xf32, #tpu.memory_space<vmem>>, vector<1x128xf32>
    %65 = vector.broadcast %64 : vector<1x128xf32> to vector<16x128xf32>
    %66 = arith.addf %63, %65 : vector<16x128xf32>
    %67 = math.tanh %66 : vector<16x128xf32>
    %68 = arith.truncf %67 : vector<16x128xf32> to vector<16x128xbf16>
    %c0_43 = arith.constant 0 : index
    %c0_44 = arith.constant 0 : index
    %69 = vector.load %arg12[%c0_43, %c0_44] : memref<128x128xbf16, #tpu.memory_space<vmem>>, vector<128x128xbf16>
    %cst_45 = arith.constant dense<0.000000e+00> : vector<16x128xf32>
    %70 = tpu.matmul %68, %69, %cst_45 {dimension_numbers = #tpu.dot_dimension_numbers<[1], [0], [0], [1], [0, 0, 1, 1], [], []>} : vector<16x128xbf16>, vector<128x128xbf16>, vector<16x128xf32> -> vector<16x128xf32>
    %71 = arith.addf %30, %70 : vector<16x128xf32>
    %c0_46 = arith.constant 0 : index
    %c0_47 = arith.constant 0 : index
    %72 = vector.load %arg13[%c0_46, %c0_47] : memref<1x128xf32, #tpu.memory_space<vmem>>, vector<1x128xf32>
    %73 = vector.broadcast %72 : vector<1x128xf32> to vector<16x128xf32>
    %74 = arith.addf %71, %73 : vector<16x128xf32>
    %c0_48 = arith.constant 0 : index
    %c0_49 = arith.constant 0 : index
    %75 = vector.load %arg14[%c0_48, %c0_49] : memref<16x128xf32, #tpu.memory_space<vmem>>, vector<16x128xf32>
    tpu.vector_store %arg14[%c0_48, %c0_49], %74 {strides = array<i32>} : memref<16x128xf32, #tpu.memory_space<vmem>>, vector<16x128xf32>,
    return
  }
}

</mosaic_0001>

<llo_original>
// kernel: tpu_custom_call.1
$region0: #{tpu_custom_call.1}
  #allocation0 [shape = 'u32[]', space=smem, size = 0x4, offset = 0x4, fixed_abs, tag = 'smem constant byte address 0x4 - core index']
  #allocation1 [shape = 'u32[144,128]{1,0:T(1,128)}', space=vmem, size = 0x12000, scoped, tag = 'internal scratch']
  #allocation2 [shape = 'bf16[16,384]{1,0:T(16,128)(2,1)}', space=vmem, size = 0x3000, scoped, tag = 'scratch operand']
  %s0 = inlined_call_operand.hbm [shape: bf16[16,16], index: 0, kind: input, shape index: {}]
  %s1 = inlined_call_operand.hbm [shape: bf16[16,128], index: 1, kind: input, shape index: {}]
  %s2 = inlined_call_operand.hbm [shape: bf16[128,128], index: 2, kind: input, shape index: {}]
  %s3 = inlined_call_operand.hbm [shape: f32[1,128], index: 3, kind: input, shape index: {}]
  %s4 = inlined_call_operand.hbm [shape: bf16[128,128], index: 4, kind: input, shape index: {}]
  %s5 = inlined_call_operand.hbm [shape: f32[1,128], index: 5, kind: input, shape index: {}]
  %s6 = inlined_call_operand.hbm [shape: bf16[16,16], index: 6, kind: input, shape index: {}]
  %s7 = inlined_call_operand.hbm [shape: bf16[384,256], index: 7, kind: input, shape index: {}]
  %s8 = inlined_call_operand.hbm [shape: f32[1,128], index: 8, kind: input, shape index: {}]
  %s9 = inlined_call_operand.hbm [shape: f32[1,128], index: 9, kind: input, shape index: {}]
  %s10 = inlined_call_operand.hbm [shape: f32[1,128], index: 10, kind: input, shape index: {}]
  %s11 = inlined_call_operand.hbm [shape: f32[16,16], index: 11, kind: input, shape index: {}]
  %s12 = inlined_call_operand.hbm [shape: bf16[128,128], index: 12, kind: input, shape index: {}]
  %s13 = inlined_call_operand.hbm [shape: f32[1,128], index: 13, kind: input, shape index: {}]
  %s14 = inlined_call_operand.hbm [shape: f32[16,128], index: 14, kind: output, shape index: {}]
  %s15 = sld [smem:[#allocation0]]
  $region122: #{tpu_custom_call.1} parent=0
    _
  %s17 = ssub.s32 1, %s15
  %s18 = scalar_select 0, %s17, %s15
  $region1: #{tpu_custom_call.1} parent=0
    #allocation3 [shape = 'u8[4096]{0}', space=vmem, size = 0x1000, scoped, tag = 'input window, operand 0, single buffered']
    #allocation4 [shape = 's32[1]{0}', space=sflag, size = 0x4, scoped, tag = 'scoped memory for tpu_custom_call.1']
    #allocation5 [shape = 's32[1]{0}', space=sflag, size = 0x4, scoped, tag = 'scoped memory for tpu_custom_call.1']
    #allocation6 [shape = 'u8[4096]{0}', space=vmem, size = 0x1000, scoped, tag = 'input window, operand 1, single buffered']
    #allocation7 [shape = 's32[1]{0}', space=sflag, size = 0x4, scoped, tag = 'scoped memory for tpu_custom_call.1']
    #allocation8 [shape = 'u8[32768]{0}', space=vmem, size = 0x8000, scoped, tag = 'input window, operand 2, single buffered']
    #allocation9 [shape = 'u8[512]{0}', space=vmem, size = 0x400, scoped, tag = 'input window, operand 3, single buffered']
    #allocation10 [shape = 's32[1]{0}', space=sflag, size = 0x4, scoped, tag = 'scoped memory for tpu_custom_call.1']
    #allocation11 [shape = 'u8[32768]{0}', space=vmem, size = 0x8000, scoped, tag = 'input window, operand 4, single buffered']
    #allocation12 [shape = 'u8[512]{0}', space=vmem, size = 0x400, scoped, tag = 'input window, operand 5, single buffered']
    #allocation13 [shape = 's32[1]{0}', space=sflag, size = 0x4, scoped, tag = 'scoped memory for tpu_custom_call.1']
    #allocation14 [shape = 'u8[4096]{0}', space=vmem, size = 0x1000, scoped, tag = 'input window, operand 6, single buffered']
    #allocation15 [shape = 'u8[196608]{0}', space=vmem, size = 0x30000, scoped, tag = 'input window, operand 7, single buffered']
    #allocation16 [shape = 's32[1]{0}', space=sflag, size = 0x4, scoped, tag = 'scoped memory for tpu_custom_call.1']
    #allocation17 [shape = 'u8[512]{0}', space=vmem, size = 0x400, scoped, tag = 'input window, operand 8, single buffered']
    #allocation18 [shape = 'u8[512]{0}', space=vmem, size = 0x400, scoped, tag = 'input window, operand 9, single buffered']
    #allocation19 [shape = 's32[1]{0}', space=sflag, size = 0x4, scoped, tag = 'scoped memory for tpu_custom_call.1']
    #allocation20 [shape = 'u8[512]{0}', space=vmem, size = 0x400, scoped, tag = 'input window, operand 10, single buffered']
    #allocation21 [shape = 'u8[8192]{0}', space=vmem, size = 0x2000, scoped, tag = 'input window, operand 11, single buffered']
    #allocation22 [shape = 's32[1]{0}', space=sflag, size = 0x4, scoped, tag = 'scoped memory for tpu_custom_call.1']
    #allocation23 [shape = 'u8[32768]{0}', space=vmem, size = 0x8000, scoped, tag = 'input window, operand 12, single buffered']
    #allocation24 [shape = 'u8[512]{0}', space=vmem, size = 0x400, scoped, tag = 'input window, operand 13, single buffered']
    #allocation25 [shape = 's32[1]{0}', space=sflag, size = 0x4, scoped, tag = 'scoped memory for tpu_custom_call.1']
    #allocation26 [shape = 'u8[8192]{0}', space=vmem, size = 0x2000, scoped, tag = 'output window, operand 0, single buffered']
    %19 = vsyncpa [#allocation4], 0
    %20 = vsyncpa [#allocation7], 0
    %21 = vsyncpa [#allocation10], 0
    %22 = vsyncpa [#allocation13], 0
    %23 = vsyncpa [#allocation16], 0
    %24 = vsyncpa [#allocation19], 0
    %25 = vsyncpa [#allocation22], 0
    %26 = vsyncpa [#allocation25], 0
    %27 = vsyncpa [#allocation5], 0
    // Predicated region
    $region2: #{tpu_custom_call.1} parent=1 // pred_check
      _
    $region3: #{tpu_custom_call.1} parent=1 // pred_check_branch
      %29 = sbr.rel (0) target = $region5
    $region4: #{tpu_custom_call.1} parent=1 // pred_region
      %s31 = ssub.s32 128, 128
      %32 = vsyncadd [#allocation4], %s31
      %s33 = sshll.u32 [#allocation3], 4
      %s34 = int_to_ptr.vmem [resolvable:$true] %s33
      %39 = dma.hbm_to_vmem [thread:$0]  %s0, 128, %s34, [#allocation4], 64, 64, 4
    $region5: #{tpu_custom_call.1} parent=1 // pred_fallthru
      _
    // Predicated region
    $region6: #{tpu_custom_call.1} parent=1 // pred_check
      _
    $region7: #{tpu_custom_call.1} parent=1 // pred_check_branch
      %41 = sbr.rel (0) target = $region9
    $region8: #{tpu_custom_call.1} parent=1 // pred_region
      %s43 = ssub.s32 128, 128
      %44 = vsyncadd [#allocation7], %s43
      %s45 = sshll.u32 [#allocation6], 4
      %s46 = int_to_ptr.vmem [resolvable:$true] %s45
      %51 = dma.hbm_to_vmem [thread:$0]  %s1, 128, %s46, [#allocation7], 64, 64, 4
    $region9: #{tpu_custom_call.1} parent=1 // pred_fallthru
      _
    // Predicated region
    $region10: #{tpu_custom_call.1} parent=1 // pred_check
      _
    $region11: #{tpu_custom_call.1} parent=1 // pred_check_branch
      %53 = sbr.rel (0) target = $region13
    $region12: #{tpu_custom_call.1} parent=1 // pred_region
      %s55 = ssub.s32 1024, 1024
      %56 = vsyncadd [#allocation7], %s55
      %s57 = sshll.u32 [#allocation8], 4
      %s58 = int_to_ptr.vmem [resolvable:$true] %s57
      %63 = dma.hbm_to_vmem [thread:$0]  %s2, 1024, %s58, [#allocation7], 64, 64, 4
    $region13: #{tpu_custom_call.1} parent=1 // pred_fallthru
      _
    // Predicated region
    $region14: #{tpu_custom_call.1} parent=1 // pred_check
      _
    $region15: #{tpu_custom_call.1} parent=1 // pred_check_branch
      %65 = sbr.rel (0) target = $region17
    $region16: #{tpu_custom_call.1} parent=1 // pred_region
      %s67 = ssub.s32 16, 16
      %68 = vsyncadd [#allocation10], %s67
      %s70 = sshll.u32 [#allocation9], 4
      %s71 = int_to_ptr.vmem [resolvable:$true] %s70
      %73 = dma.hbm_to_vmem [thread:$0]  %s3, 16, %s71, [#allocation10]
    $region17: #{tpu_custom_call.1} parent=1 // pred_fallthru
      _
    // Predicated region
    $region18: #{tpu_custom_call.1} parent=1 // pred_check
      _
    $region19: #{tpu_custom_call.1} parent=1 // pred_check_branch
      %75 = sbr.rel (0) target = $region21
    $region20: #{tpu_custom_call.1} parent=1 // pred_region
      %s77 = ssub.s32 1024, 1024
      %78 = vsyncadd [#allocation10], %s77
      %s79 = sshll.u32 [#allocation11], 4
      %s80 = int_to_ptr.vmem [resolvable:$true] %s79
      %85 = dma.hbm_to_vmem [thread:$0]  %s4, 1024, %s80, [#allocation10], 64, 64, 4
    $region21: #{tpu_custom_call.1} parent=1 // pred_fallthru
      _
    // Predicated region
    $region22: #{tpu_custom_call.1} parent=1 // pred_check
      _
    $region23: #{tpu_custom_call.1} parent=1 // pred_check_branch
      %87 = sbr.rel (0) target = $region25
    $region24: #{tpu_custom_call.1} parent=1 // pred_region
      %s89 = ssub.s32 16, 16
      %90 = vsyncadd [#allocation13], %s89
      %s92 = sshll.u32 [#allocation12], 4
      %s93 = int_to_ptr.vmem [resolvable:$true] %s92
      %95 = dma.hbm_to_vmem [thread:$0]  %s5, 16, %s93, [#allocation13]
    $region25: #{tpu_custom_call.1} parent=1 // pred_fallthru
      _
    // Predicated region
    $region26: #{tpu_custom_call.1} parent=1 // pred_check
      _
    $region27: #{tpu_custom_call.1} parent=1 // pred_check_branch
      %97 = sbr.rel (0) target = $region29
    $region28: #{tpu_custom_call.1} parent=1 // pred_region
      %s99 = ssub.s32 128, 128
      %100 = vsyncadd [#allocation13], %s99
      %s101 = sshll.u32 [#allocation14], 4
      %s102 = int_to_ptr.vmem [resolvable:$true] %s101
      %107 = dma.hbm_to_vmem [thread:$0]  %s6, 128, %s102, [#allocation13], 64, 64, 4
    $region29: #{tpu_custom_call.1} parent=1 // pred_fallthru
      _
    // Predicated region
    $region30: #{tpu_custom_call.1} parent=1 // pred_check
      _
    $region31: #{tpu_custom_call.1} parent=1 // pred_check_branch
      %109 = sbr.rel (0) target = $region33
    $region32: #{tpu_custom_call.1} parent=1 // pred_region
      %s111 = ssub.s32 6144, 6144
      %112 = vsyncadd [#allocation16], %s111
      %s113 = sshll.u32 [#allocation15], 4
      %s114 = int_to_ptr.vmem [resolvable:$true] %s113
      %119 = dma.hbm_to_vmem [thread:$0]  %s7, 6144, %s114, [#allocation16], 128, 128, 8
    $region33: #{tpu_custom_call.1} parent=1 // pred_fallthru
      _
    // Predicated region
    $region34: #{tpu_custom_call.1} parent=1 // pred_check
      _
    $region35: #{tpu_custom_call.1} parent=1 // pred_check_branch
      %121 = sbr.rel (0) target = $region37
    $region36: #{tpu_custom_call.1} parent=1 // pred_region
      %s123 = ssub.s32 16, 16
      %124 = vsyncadd [#allocation16], %s123
      %s126 = sshll.u32 [#allocation17], 4
      %s127 = int_to_ptr.vmem [resolvable:$true] %s126
      %129 = dma.hbm_to_vmem [thread:$0]  %s8, 16, %s127, [#allocation16]
    $region37: #{tpu_custom_call.1} parent=1 // pred_fallthru
      _
    // Predicated region
    $region38: #{tpu_custom_call.1} parent=1 // pred_check
      _
    $region39: #{tpu_custom_call.1} parent=1 // pred_check_branch
      %131 = sbr.rel (0) target = $region41
    $region40: #{tpu_custom_call.1} parent=1 // pred_region
      %s133 = ssub.s32 16, 16
      %134 = vsyncadd [#allocation19], %s133
      %s136 = sshll.u32 [#allocation18], 4
      %s137 = int_to_ptr.vmem [resolvable:$true] %s136
      %139 = dma.hbm_to_vmem [thread:$0]  %s9, 16, %s137, [#allocation19]
    $region41: #{tpu_custom_call.1} parent=1 // pred_fallthru
      _
    // Predicated region
    $region42: #{tpu_custom_call.1} parent=1 // pred_check
      _
    $region43: #{tpu_custom_call.1} parent=1 // pred_check_branch
      %141 = sbr.rel (0) target = $region45
    $region44: #{tpu_custom_call.1} parent=1 // pred_region
      %s143 = ssub.s32 16, 16
      %144 = vsyncadd [#allocation19], %s143
      %s146 = sshll.u32 [#allocation20], 4
      %s147 = int_to_ptr.vmem [resolvable:$true] %s146
      %149 = dma.hbm_to_vmem [thread:$0]  %s10, 16, %s147, [#allocation19]
    $region45: #{tpu_custom_call.1} parent=1 // pred_fallthru
      _
    // Predicated region
    $region46: #{tpu_custom_call.1} parent=1 // pred_check
      _
    $region47: #{tpu_custom_call.1} parent=1 // pred_check_branch
      %151 = sbr.rel (0) target = $region49
    $region48: #{tpu_custom_call.1} parent=1 // pred_region
      %s153 = ssub.s32 256, 256
      %154 = vsyncadd [#allocation22], %s153
      %s155 = sshll.u32 [#allocation21], 4
      %s156 = int_to_ptr.vmem [resolvable:$true] %s155
      %161 = dma.hbm_to_vmem [thread:$0]  %s11, 256, %s156, [#allocation22], 128, 128, 8
    $region49: #{tpu_custom_call.1} parent=1 // pred_fallthru
      _
    // Predicated region
    $region50: #{tpu_custom_call.1} parent=1 // pred_check
      _
    $region51: #{tpu_custom_call.1} parent=1 // pred_check_branch
      %163 = sbr.rel (0) target = $region53
    $region52: #{tpu_custom_call.1} parent=1 // pred_region
      %s165 = ssub.s32 1024, 1024
      %166 = vsyncadd [#allocation22], %s165
      %s167 = sshll.u32 [#allocation23], 4
      %s168 = int_to_ptr.vmem [resolvable:$true] %s167
      %173 = dma.hbm_to_vmem [thread:$0]  %s12, 1024, %s168, [#allocation22], 64, 64, 4
    $region53: #{tpu_custom_call.1} parent=1 // pred_fallthru
      _
    // Predicated region
    $region54: #{tpu_custom_call.1} parent=1 // pred_check
      _
    $region55: #{tpu_custom_call.1} parent=1 // pred_check_branch
      %175 = sbr.rel (0) target = $region57
    $region56: #{tpu_custom_call.1} parent=1 // pred_region
      %s177 = ssub.s32 16, 16
      %178 = vsyncadd [#allocation25], %s177
      %s180 = sshll.u32 [#allocation24], 4
      %s181 = int_to_ptr.vmem [resolvable:$true] %s180
      %183 = dma.hbm_to_vmem [thread:$0]  %s13, 16, %s181, [#allocation25]
    $region57: #{tpu_custom_call.1} parent=1 // pred_fallthru
      _
    // Predicated region
    $region58: #{tpu_custom_call.1} parent=1 // pred_check
      _
    $region59: #{tpu_custom_call.1} parent=1 // pred_check_branch
      %185 = sbr.rel (0) target = $region61
    $region60: #{tpu_custom_call.1} parent=1 // pred_region
      %186 = dma.done [#allocation4], 128
    $region61: #{tpu_custom_call.1} parent=1 // pred_fallthru
      _
    // Predicated region
    $region62: #{tpu_custom_call.1} parent=1 // pred_check
      _
    $region63: #{tpu_custom_call.1} parent=1 // pred_check_branch
      %188 = sbr.rel (0) target = $region65
    $region64: #{tpu_custom_call.1} parent=1 // pred_region
      %189 = dma.done [#allocation7], 128
    $region65: #{tpu_custom_call.1} parent=1 // pred_fallthru
      _
    // Predicated region
    $region66: #{tpu_custom_call.1} parent=1 // pred_check
      _
    $region67: #{tpu_custom_call.1} parent=1 // pred_check_branch
      %191 = sbr.rel (0) target = $region69
    $region68: #{tpu_custom_call.1} parent=1 // pred_region
      %192 = dma.done [#allocation7], 1024
    $region69: #{tpu_custom_call.1} parent=1 // pred_fallthru
      _
    // Predicated region
    $region70: #{tpu_custom_call.1} parent=1 // pred_check
      _
    $region71: #{tpu_custom_call.1} parent=1 // pred_check_branch
      %194 = sbr.rel (0) target = $region73
    $region72: #{tpu_custom_call.1} parent=1 // pred_region
      %195 = dma.done [#allocation10], 16
    $region73: #{tpu_custom_call.1} parent=1 // pred_fallthru
      _
    // Predicated region
    $region74: #{tpu_custom_call.1} parent=1 // pred_check
      _
    $region75: #{tpu_custom_call.1} parent=1 // pred_check_branch
      %197 = sbr.rel (0) target = $region77
    $region76: #{tpu_custom_call.1} parent=1 // pred_region
      %198 = dma.done [#allocation10], 1024
    $region77: #{tpu_custom_call.1} parent=1 // pred_fallthru
      _
    // Predicated region
    $region78: #{tpu_custom_call.1} parent=1 // pred_check
      _
    $region79: #{tpu_custom_call.1} parent=1 // pred_check_branch
      %200 = sbr.rel (0) target = $region81
    $region80: #{tpu_custom_call.1} parent=1 // pred_region
      %201 = dma.done [#allocation13], 16
    $region81: #{tpu_custom_call.1} parent=1 // pred_fallthru
      _
    // Predicated region
    $region82: #{tpu_custom_call.1} parent=1 // pred_check
      _
    $region83: #{tpu_custom_call.1} parent=1 // pred_check_branch
      %203 = sbr.rel (0) target = $region85
    $region84: #{tpu_custom_call.1} parent=1 // pred_region
      %204 = dma.done [#allocation13], 128
    $region85: #{tpu_custom_call.1} parent=1 // pred_fallthru
      _
    // Predicated region
    $region86: #{tpu_custom_call.1} parent=1 // pred_check
      _
    $region87: #{tpu_custom_call.1} parent=1 // pred_check_branch
      %206 = sbr.rel (0) target = $region89
    $region88: #{tpu_custom_call.1} parent=1 // pred_region
      %207 = dma.done [#allocation16], 6144
    $region89: #{tpu_custom_call.1} parent=1 // pred_fallthru
      _
    // Predicated region
    $region90: #{tpu_custom_call.1} parent=1 // pred_check
      _
    $region91: #{tpu_custom_call.1} parent=1 // pred_check_branch
      %209 = sbr.rel (0) target = $region93
    $region92: #{tpu_custom_call.1} parent=1 // pred_region
      %210 = dma.done [#allocation16], 16
    $region93: #{tpu_custom_call.1} parent=1 // pred_fallthru
      _
    // Predicated region
    $region94: #{tpu_custom_call.1} parent=1 // pred_check
      _
    $region95: #{tpu_custom_call.1} parent=1 // pred_check_branch
      %212 = sbr.rel (0) target = $region97
    $region96: #{tpu_custom_call.1} parent=1 // pred_region
      %213 = dma.done [#allocation19], 16
    $region97: #{tpu_custom_call.1} parent=1 // pred_fallthru
      _
    // Predicated region
    $region98: #{tpu_custom_call.1} parent=1 // pred_check
      _
    $region99: #{tpu_custom_call.1} parent=1 // pred_check_branch
      %215 = sbr.rel (0) target = $region101
    $region100: #{tpu_custom_call.1} parent=1 // pred_region
      %216 = dma.done [#allocation19], 16
    $region101: #{tpu_custom_call.1} parent=1 // pred_fallthru
      _
    // Predicated region
    $region102: #{tpu_custom_call.1} parent=1 // pred_check
      _
    $region103: #{tpu_custom_call.1} parent=1 // pred_check_branch
      %218 = sbr.rel (0) target = $region105
    $region104: #{tpu_custom_call.1} parent=1 // pred_region
      %219 = dma.done [#allocation22], 256
    $region105: #{tpu_custom_call.1} parent=1 // pred_fallthru
      _
    // Predicated region
    $region106: #{tpu_custom_call.1} parent=1 // pred_check
      _
    $region107: #{tpu_custom_call.1} parent=1 // pred_check_branch
      %221 = sbr.rel (0) target = $region109
    $region108: #{tpu_custom_call.1} parent=1 // pred_region
      %222 = dma.done [#allocation22], 1024
    $region109: #{tpu_custom_call.1} parent=1 // pred_fallthru
      _
    // Predicated region
    $region110: #{tpu_custom_call.1} parent=1 // pred_check
      _
    $region111: #{tpu_custom_call.1} parent=1 // pred_check_branch
      %224 = sbr.rel (0) target = $region113
    $region112: #{tpu_custom_call.1} parent=1 // pred_region
      %225 = dma.done [#allocation25], 16
    $region113: #{tpu_custom_call.1} parent=1 // pred_fallthru
      _
    %v227 = vld [vmem:[#allocation3] sm:$0xf]
    %v228 = vld [vmem:[#allocation3 + $0x4] sm:$0xf]
    %v229 = vld [vmem:[#allocation6] sm:$0xf]
    %v230 = vld [vmem:[#allocation6 + $0x4] sm:$0xf]
    %v233 = vunpack.c.l.b16 %v229
    %v234 = vunpack.c.l.b16 %v230
    %v235 = vpack.c.b16 %v234, %v233
    %237 = vst [vmem:[#allocation2] sm:$0xff] %v235
    %v238 = vld [vmem:[#allocation8] sm:$0xf]
    %v239 = vld [vmem:[#allocation8 + $0x4] sm:$0xf]
    %v240 = vld [vmem:[#allocation8 + $0x8] sm:$0xf]
    %v241 = vld [vmem:[#allocation8 + $0xc] sm:$0xf]
    %v242 = vld [vmem:[#allocation8 + $0x10] sm:$0xf]
    %v243 = vld [vmem:[#allocation8 + $0x14] sm:$0xf]
    %v244 = vld [vmem:[#allocation8 + $0x18] sm:$0xf]
    %v245 = vld [vmem:[#allocation8 + $0x1c] sm:$0xf]
    %v246 = vld [vmem:[#allocation8 + $0x20] sm:$0xf]
    %v247 = vld [vmem:[#allocation8 + $0x24] sm:$0xf]
    %v248 = vld [vmem:[#allocation8 + $0x28] sm:$0xf]
    %v249 = vld [vmem:[#allocation8 + $0x2c] sm:$0xf]
    %v250 = vld [vmem:[#allocation8 + $0x30] sm:$0xf]
    %v251 = vld [vmem:[#allocation8 + $0x34] sm:$0xf]
    %v252 = vld [vmem:[#allocation8 + $0x38] sm:$0xf]
    %v253 = vld [vmem:[#allocation8 + $0x3c] sm:$0xf]
    %v270 = vunpack.c.l.b16 %v238
    %v271 = vunpack.c.l.b16 %v239
    %v272 = vunpack.c.l.b16 %v240
    %v273 = vunpack.c.l.b16 %v241
    %v274 = vunpack.c.l.b16 %v242
    %v275 = vunpack.c.l.b16 %v243
    %v276 = vunpack.c.l.b16 %v244
    %v277 = vunpack.c.l.b16 %v245
    %v278 = vunpack.c.l.b16 %v246
    %v279 = vunpack.c.l.b16 %v247
    %v280 = vunpack.c.l.b16 %v248
    %v281 = vunpack.c.l.b16 %v249
    %v282 = vunpack.c.l.b16 %v250
    %v283 = vunpack.c.l.b16 %v251
    %v284 = vunpack.c.l.b16 %v252
    %v285 = vunpack.c.l.b16 %v253
    %v286 = vpack.c.b16 %v271, %v270
    %v287 = vpack.c.b16 %v273, %v272
    %v288 = vpack.c.b16 %v275, %v274
    %v289 = vpack.c.b16 %v277, %v276
    %v290 = vpack.c.b16 %v279, %v278
    %v291 = vpack.c.b16 %v281, %v280
    %v292 = vpack.c.b16 %v283, %v282
    %v293 = vpack.c.b16 %v285, %v284
    %302 = vmatprep.subr.bf16.mxu0 0
    %303 = vmatpush1.bf16.msra.mxu0 %v286
    %304 = vmatprep.subr.bf16.mxu0 0
    %305 = vmatpush1.bf16.msra.mxu0 %v287
    %306 = vmatprep.subr.bf16.mxu0 0
    %307 = vmatpush1.bf16.msra.mxu0 %v288
    %308 = vmatprep.subr.bf16.mxu0 0
    %309 = vmatpush1.bf16.msra.mxu0 %v289
    %310 = vmatprep.subr.bf16.mxu0 0
    %311 = vmatpush1.bf16.msra.mxu0 %v290
    %312 = vmatprep.subr.bf16.mxu0 0
    %313 = vmatpush1.bf16.msra.mxu0 %v291
    %314 = vmatprep.subr.bf16.mxu0 0
    %315 = vmatpush1.bf16.msra.mxu0 %v292
    %316 = vmatprep.subr.bf16.mxu0 0
    %317 = vmatpush1.bf16.msra.mxu0 %v293
    %318 = vmatprep.subr.bf16.mxu0 0
    %319 = vmatpush1.bf16.msra.mxu0 0
    %320 = vmatprep.subr.bf16.mxu0 0
    %321 = vmatpush1.bf16.msra.mxu0 0
    %322 = vmatprep.subr.bf16.mxu0 0
    %323 = vmatpush1.bf16.msra.mxu0 0
    %324 = vmatprep.subr.bf16.mxu0 0
    %325 = vmatpush1.bf16.msra.mxu0 0
    %326 = vmatprep.subr.bf16.mxu0 0
    %327 = vmatpush1.bf16.msra.mxu0 0
    %328 = vmatprep.subr.bf16.mxu0 0
    %329 = vmatpush1.bf16.msra.mxu0 0
    %330 = vmatprep.subr.bf16.mxu0 0
    %331 = vmatpush1.bf16.msra.mxu0 0
    %332 = vmatprep.subr.bf16.mxu0 0
    %333 = vmatpush1.bf16.msra.mxu0 0
    %334 = vmatprep.mubr.bf16.mxu0 0
    %335 = vmatmul.mubr.bf16.gmra.mrb[0].mxu0 %v235
    %v336 = vpop.f32.mrb[0].mxu0
    %v337 = vadd.f32 0.0, %v336
    %v338 = vpop.f32.mrb[0].mxu0
    %v339 = vpop.f32.mrb[0].mxu0
    %v340 = vadd.f32 0.0, %v339
    %v341 = vpop.f32.mrb[0].mxu0
    %342 = vdwg.mxu0
    %v343 = vpack.c.bf16 %v340, %v337
    %v344 = vld [vmem:[#allocation9] sm:$0x1]
    %v346 = vlaneseq
    %v347 = vshrl.u32 %v346, 7
    %v348 = vsub.s32 0, %v347
    %v349 = vrot.slane %v344, %v348
    %v353 = vunpack.c.l.b16 %v227
    %v354 = vunpack.c.l.b16 %v228
    %v355 = vpack.c.b16 %v354, %v353
    %vm356 = vcmask 130048
    %v358 = vsel %vm356, %v355, 0
    %360 = vmatprep.subr.bf16.mxu0 0
    %361 = vmatpush1.bf16.msra.mxu0 %v343
    %362 = vmatprep.subr.bf16.mxu0 0
    %363 = vmatpush1.bf16.msra.mxu0 0
    %364 = vmatprep.subr.bf16.mxu0 0
    %365 = vmatpush1.bf16.msra.mxu0 0
    %366 = vmatprep.subr.bf16.mxu0 0
    %367 = vmatpush1.bf16.msra.mxu0 0
    %368 = vmatprep.subr.bf16.mxu0 0
    %369 = vmatpush1.bf16.msra.mxu0 0
    %370 = vmatprep.subr.bf16.mxu0 0
    %371 = vmatpush1.bf16.msra.mxu0 0
    %372 = vmatprep.subr.bf16.mxu0 0
    %373 = vmatpush1.bf16.msra.mxu0 0
    %374 = vmatprep.subr.bf16.mxu0 0
    %375 = vmatpush1.bf16.msra.mxu0 0
    %376 = vmatprep.subr.bf16.mxu0 0
    %377 = vmatpush1.bf16.msra.mxu0 0
    %378 = vmatprep.subr.bf16.mxu0 0
    %379 = vmatpush1.bf16.msra.mxu0 0
    %380 = vmatprep.subr.bf16.mxu0 0
    %381 = vmatpush1.bf16.msra.mxu0 0
    %382 = vmatprep.subr.bf16.mxu0 0
    %383 = vmatpush1.bf16.msra.mxu0 0
    %384 = vmatprep.subr.bf16.mxu0 0
    %385 = vmatpush1.bf16.msra.mxu0 0
    %386 = vmatprep.subr.bf16.mxu0 0
    %387 = vmatpush1.bf16.msra.mxu0 0
    %388 = vmatprep.subr.bf16.mxu0 0
    %389 = vmatpush1.bf16.msra.mxu0 0
    %390 = vmatprep.subr.bf16.mxu0 0
    %391 = vmatpush1.bf16.msra.mxu0 0
    %392 = vmatprep.mubr.bf16.mxu0 0
    %393 = vmatmul.mubr.bf16.gmra.mrb[0].mxu0 %v358
    %v394 = vpop.f32.mrb[0].mxu0
    %v395 = vadd.f32 %v349, %v394
    %v396 = vpop.f32.mrb[0].mxu0
    %v397 = vpop.f32.mrb[0].mxu0
    %v398 = vadd.f32 %v349, %v397
    %v399 = vpop.f32.mrb[0].mxu0
    %400 = vdwg.mxu0
    %v401 = vtanh.pop %v395
    %v402 = vtanh.pop %v398
    %v403 = vpack.c.bf16 %v402, %v401
    %404 = vst [vmem:[#allocation2 + $0x8] sm:$0xff] %v403
    %v405 = vld [vmem:[#allocation11] sm:$0xf]
    %v406 = vld [vmem:[#allocation11 + $0x4] sm:$0xf]
    %v407 = vld [vmem:[#allocation11 + $0x8] sm:$0xf]
    %v408 = vld [vmem:[#allocation11 + $0xc] sm:$0xf]
    %v409 = vld [vmem:[#allocation11 + $0x10] sm:$0xf]
    %v410 = vld [vmem:[#allocation11 + $0x14] sm:$0xf]
    %v411 = vld [vmem:[#allocation11 + $0x18] sm:$0xf]
    %v412 = vld [vmem:[#allocation11 + $0x1c] sm:$0xf]
    %v413 = vld [vmem:[#allocation11 + $0x20] sm:$0xf]
    %v414 = vld [vmem:[#allocation11 + $0x24] sm:$0xf]
    %v415 = vld [vmem:[#allocation11 + $0x28] sm:$0xf]
    %v416 = vld [vmem:[#allocation11 + $0x2c] sm:$0xf]
    %v417 = vld [vmem:[#allocation11 + $0x30] sm:$0xf]
    %v418 = vld [vmem:[#allocation11 + $0x34] sm:$0xf]
    %v419 = vld [vmem:[#allocation11 + $0x38] sm:$0xf]
    %v420 = vld [vmem:[#allocation11 + $0x3c] sm:$0xf]
    %v437 = vunpack.c.l.b16 %v405
    %v438 = vunpack.c.l.b16 %v406
    %v439 = vunpack.c.l.b16 %v407
    %v440 = vunpack.c.l.b16 %v408
    %v441 = vunpack.c.l.b16 %v409
    %v442 = vunpack.c.l.b16 %v410
    %v443 = vunpack.c.l.b16 %v411
    %v444 = vunpack.c.l.b16 %v412
    %v445 = vunpack.c.l.b16 %v413
    %v446 = vunpack.c.l.b16 %v414
    %v447 = vunpack.c.l.b16 %v415
    %v448 = vunpack.c.l.b16 %v416
    %v449 = vunpack.c.l.b16 %v417
    %v450 = vunpack.c.l.b16 %v418
    %v451 = vunpack.c.l.b16 %v419
    %v452 = vunpack.c.l.b16 %v420
    %v453 = vpack.c.b16 %v438, %v437
    %v454 = vpack.c.b16 %v440, %v439
    %v455 = vpack.c.b16 %v442, %v441
    %v456 = vpack.c.b16 %v444, %v443
    %v457 = vpack.c.b16 %v446, %v445
    %v458 = vpack.c.b16 %v448, %v447
    %v459 = vpack.c.b16 %v450, %v449
    %v460 = vpack.c.b16 %v452, %v451
    %469 = vmatprep.subr.bf16.mxu0 0
    %470 = vmatpush1.bf16.msra.mxu0 %v453
    %471 = vmatprep.subr.bf16.mxu0 0
    %472 = vmatpush1.bf16.msra.mxu0 %v454
    %473 = vmatprep.subr.bf16.mxu0 0
    %474 = vmatpush1.bf16.msra.mxu0 %v455
    %475 = vmatprep.subr.bf16.mxu0 0
    %476 = vmatpush1.bf16.msra.mxu0 %v456
    %477 = vmatprep.subr.bf16.mxu0 0
    %478 = vmatpush1.bf16.msra.mxu0 %v457
    %479 = vmatprep.subr.bf16.mxu0 0
    %480 = vmatpush1.bf16.msra.mxu0 %v458
    %481 = vmatprep.subr.bf16.mxu0 0
    %482 = vmatpush1.bf16.msra.mxu0 %v459
    %483 = vmatprep.subr.bf16.mxu0 0
    %484 = vmatpush1.bf16.msra.mxu0 %v460
    %485 = vmatprep.subr.bf16.mxu0 0
    %486 = vmatpush1.bf16.msra.mxu0 0
    %487 = vmatprep.subr.bf16.mxu0 0
    %488 = vmatpush1.bf16.msra.mxu0 0
    %489 = vmatprep.subr.bf16.mxu0 0
    %490 = vmatpush1.bf16.msra.mxu0 0
    %491 = vmatprep.subr.bf16.mxu0 0
    %492 = vmatpush1.bf16.msra.mxu0 0
    %493 = vmatprep.subr.bf16.mxu0 0
    %494 = vmatpush1.bf16.msra.mxu0 0
    %495 = vmatprep.subr.bf16.mxu0 0
    %496 = vmatpush1.bf16.msra.mxu0 0
    %497 = vmatprep.subr.bf16.mxu0 0
    %498 = vmatpush1.bf16.msra.mxu0 0
    %499 = vmatprep.subr.bf16.mxu0 0
    %500 = vmatpush1.bf16.msra.mxu0 0
    %501 = vmatprep.mubr.bf16.mxu0 0
    %502 = vmatmul.mubr.bf16.gmra.mrb[0].mxu0 %v403
    %v503 = vpop.f32.mrb[0].mxu0
    %v504 = vadd.f32 0.0, %v503
    %v505 = vpop.f32.mrb[0].mxu0
    %v506 = vpop.f32.mrb[0].mxu0
    %v507 = vadd.f32 0.0, %v506
    %v508 = vpop.f32.mrb[0].mxu0
    %509 = vdwg.mxu0
    %v510 = vpack.c.bf16 %v507, %v504
    %v511 = vld [vmem:[#allocation12] sm:$0x1]
    %v513 = vlaneseq
    %v514 = vshrl.u32 %v513, 7
    %v515 = vsub.s32 0, %v514
    %v516 = vrot.slane %v511, %v515
    %518 = vmatprep.subr.bf16.mxu0 0
    %519 = vmatpush1.bf16.msra.mxu0 %v510
    %520 = vmatprep.subr.bf16.mxu0 0
    %521 = vmatpush1.bf16.msra.mxu0 0
    %522 = vmatprep.subr.bf16.mxu0 0
    %523 = vmatpush1.bf16.msra.mxu0 0
    %524 = vmatprep.subr.bf16.mxu0 0
    %525 = vmatpush1.bf16.msra.mxu0 0
    %526 = vmatprep.subr.bf16.mxu0 0
    %527 = vmatpush1.bf16.msra.mxu0 0
    %528 = vmatprep.subr.bf16.mxu0 0
    %529 = vmatpush1.bf16.msra.mxu0 0
    %530 = vmatprep.subr.bf16.mxu0 0
    %531 = vmatpush1.bf16.msra.mxu0 0
    %532 = vmatprep.subr.bf16.mxu0 0
    %533 = vmatpush1.bf16.msra.mxu0 0
    %534 = vmatprep.subr.bf16.mxu0 0
    %535 = vmatpush1.bf16.msra.mxu0 0
    %536 = vmatprep.subr.bf16.mxu0 0
    %537 = vmatpush1.bf16.msra.mxu0 0
    %538 = vmatprep.subr.bf16.mxu0 0
    %539 = vmatpush1.bf16.msra.mxu0 0
    %540 = vmatprep.subr.bf16.mxu0 0
    %541 = vmatpush1.bf16.msra.mxu0 0
    %542 = vmatprep.subr.bf16.mxu0 0
    %543 = vmatpush1.bf16.msra.mxu0 0
    %544 = vmatprep.subr.bf16.mxu0 0
    %545 = vmatpush1.bf16.msra.mxu0 0
    %546 = vmatprep.subr.bf16.mxu0 0
    %547 = vmatpush1.bf16.msra.mxu0 0
    %548 = vmatprep.subr.bf16.mxu0 0
    %549 = vmatpush1.bf16.msra.mxu0 0
    %550 = vmatprep.mubr.bf16.mxu0 0
    %551 = vmatmul.mubr.bf16.gmra.mrb[0].mxu0 %v358
    %v552 = vpop.f32.mrb[0].mxu0
    %v553 = vadd.f32 %v516, %v552
    %v554 = vpop.f32.mrb[0].mxu0
    %v555 = vpop.f32.mrb[0].mxu0
    %v556 = vadd.f32 %v516, %v555
    %v557 = vpop.f32.mrb[0].mxu0
    %558 = vdwg.mxu0
    %v559 = vtanh.pop %v553
    %v560 = vtanh.pop %v556
    %v561 = vpack.c.bf16 %v560, %v559
    %562 = vst [vmem:[#allocation2 + $0x10] sm:$0xff] %v561
    %v563 = vld [vmem:[#allocation14] sm:$0xf]
    %v564 = vld [vmem:[#allocation14 + $0x4] sm:$0xf]
    %v565 = vld [vmem:[#allocation2] sm:$0xff]
    %v566 = vld [vmem:[#allocation2 + $0x8] sm:$0xff]
    %v567 = vld [vmem:[#allocation2 + $0x10] sm:$0xff]
    %v570 = vunpack.c.l.b16 %v563
    %v571 = vunpack.c.l.b16 %v564
    %v572 = vpack.c.b16 %v571, %v570
    %v574 = vsel %vm356, %v572, 0
    %576 = vmatprep.subr.bf16.mxu0 %v566
    %577 = vmatpush1.bf16.msra.mxu0 %v565
    %578 = vmatprep.subr.bf16.mxu0 0
    %579 = vmatpush1.bf16.msra.mxu0 0
    %580 = vmatprep.subr.bf16.mxu0 0
    %581 = vmatpush1.bf16.msra.mxu0 0
    %582 = vmatprep.subr.bf16.mxu0 0
    %583 = vmatpush1.bf16.msra.mxu0 0
    %584 = vmatprep.subr.bf16.mxu0 0
    %585 = vmatpush1.bf16.msra.mxu0 0
    %586 = vmatprep.subr.bf16.mxu0 0
    %587 = vmatpush1.bf16.msra.mxu0 0
    %588 = vmatprep.subr.bf16.mxu0 0
    %589 = vmatpush1.bf16.msra.mxu0 0
    %590 = vmatprep.subr.bf16.mxu0 0
    %591 = vmatpush1.bf16.msra.mxu0 0
    %592 = vmatprep.subr.bf16.mxu0 0
    %593 = vmatpush1.bf16.msra.mxu0 0
    %594 = vmatprep.subr.bf16.mxu0 0
    %595 = vmatpush1.bf16.msra.mxu0 0
    %596 = vmatprep.subr.bf16.mxu0 0
    %597 = vmatpush1.bf16.msra.mxu0 0
    %598 = vmatprep.subr.bf16.mxu0 0
    %599 = vmatpush1.bf16.msra.mxu0 0
    %600 = vmatprep.subr.bf16.mxu0 0
    %601 = vmatpush1.bf16.msra.mxu0 0
    %602 = vmatprep.subr.bf16.mxu0 0
    %603 = vmatpush1.bf16.msra.mxu0 0
    %604 = vmatprep.subr.bf16.mxu0 0
    %605 = vmatpush1.bf16.msra.mxu0 0
    %606 = vmatprep.subr.bf16.mxu0 0
    %607 = vmatpush1.bf16.msra.mxu0 0
    %608 = vmatprep.mubr.bf16.mxu0 0
    %609 = vmatmul.mubr.bf16.gmra.mrb[0].mxu0 %v574
    %v610 = vpop.f32.mrb[0].mxu0
    %v611 = vadd.f32 0.0, %v610
    %v612 = vpop.f32.mrb[0].mxu0
    %v613 = vadd.f32 0.0, %v612
    %v614 = vpop.f32.mrb[0].mxu0
    %v615 = vadd.f32 0.0, %v614
    %v616 = vpop.f32.mrb[0].mxu0
    %v617 = vadd.f32 0.0, %v616
    %618 = vdwg.mxu0
    %619 = vmatprep.subr.bf16.mxu0 0
    %620 = vmatpush1.bf16.msra.mxu0 %v567
    %621 = vmatprep.subr.bf16.mxu0 0
    %622 = vmatpush1.bf16.msra.mxu0 0
    %623 = vmatprep.subr.bf16.mxu0 0
    %624 = vmatpush1.bf16.msra.mxu0 0
    %625 = vmatprep.subr.bf16.mxu0 0
    %626 = vmatpush1.bf16.msra.mxu0 0
    %627 = vmatprep.subr.bf16.mxu0 0
    %628 = vmatpush1.bf16.msra.mxu0 0
    %629 = vmatprep.subr.bf16.mxu0 0
    %630 = vmatpush1.bf16.msra.mxu0 0
    %631 = vmatprep.subr.bf16.mxu0 0
    %632 = vmatpush1.bf16.msra.mxu0 0
    %633 = vmatprep.subr.bf16.mxu0 0
    %634 = vmatpush1.bf16.msra.mxu0 0
    %635 = vmatprep.subr.bf16.mxu0 0
    %636 = vmatpush1.bf16.msra.mxu0 0
    %637 = vmatprep.subr.bf16.mxu0 0
    %638 = vmatpush1.bf16.msra.mxu0 0
    %639 = vmatprep.subr.bf16.mxu0 0
    %640 = vmatpush1.bf16.msra.mxu0 0
    %641 = vmatprep.subr.bf16.mxu0 0
    %642 = vmatpush1.bf16.msra.mxu0 0
    %643 = vmatprep.subr.bf16.mxu0 0
    %644 = vmatpush1.bf16.msra.mxu0 0
    %645 = vmatprep.subr.bf16.mxu0 0
    %646 = vmatpush1.bf16.msra.mxu0 0
    %647 = vmatprep.subr.bf16.mxu0 0
    %648 = vmatpush1.bf16.msra.mxu0 0
    %649 = vmatprep.subr.bf16.mxu0 0
    %650 = vmatpush1.bf16.msra.mxu0 0
    %651 = vmatprep.mubr.bf16.mxu0 0
    %652 = vmatmul.mubr.bf16.gmra.mrb[0].mxu0 %v574
    %v653 = vpop.f32.mrb[0].mxu0
    %v654 = vadd.f32 0.0, %v653
    %v655 = vpop.f32.mrb[0].mxu0
    %v656 = vpop.f32.mrb[0].mxu0
    %v657 = vadd.f32 0.0, %v656
    %v658 = vpop.f32.mrb[0].mxu0
    %659 = vdwg.mxu0
    %v660 = vpack.c.bf16 %v615, %v611
    %v661 = vpack.c.bf16 %v617, %v613
    %v662 = vpack.c.bf16 %v657, %v654
    %v663 = vld [vmem:[#allocation15] sm:$0xff]
    %v664 = vld [vmem:[#allocation15 + $0x8] sm:$0xff]
    %v665 = vld [vmem:[#allocation15 + $0x10] sm:$0xff]
    %v666 = vld [vmem:[#allocation15 + $0x18] sm:$0xff]
    %v667 = vld [vmem:[#allocation15 + $0x20] sm:$0xff]
    %v668 = vld [vmem:[#allocation15 + $0x28] sm:$0xff]
    %v669 = vld [vmem:[#allocation15 + $0x30] sm:$0xff]
    %v670 = vld [vmem:[#allocation15 + $0x38] sm:$0xff]
    %v671 = vld [vmem:[#allocation15 + $0x40] sm:$0xff]
    %v672 = vld [vmem:[#allocation15 + $0x48] sm:$0xff]
    %v673 = vld [vmem:[#allocation15 + $0x50] sm:$0xff]
    %v674 = vld [vmem:[#allocation15 + $0x58] sm:$0xff]
    %v675 = vld [vmem:[#allocation15 + $0x60] sm:$0xff]
    %v676 = vld [vmem:[#allocation15 + $0x68] sm:$0xff]
    %v677 = vld [vmem:[#allocation15 + $0x70] sm:$0xff]
    %v678 = vld [vmem:[#allocation15 + $0x78] sm:$0xff]
    %v679 = vld [vmem:[#allocation15 + $0x80] sm:$0xff]
    %v680 = vld [vmem:[#allocation15 + $0x88] sm:$0xff]
    %v681 = vld [vmem:[#allocation15 + $0x90] sm:$0xff]
    %v682 = vld [vmem:[#allocation15 + $0x98] sm:$0xff]
    %v683 = vld [vmem:[#allocation15 + $0xa0] sm:$0xff]
    %v684 = vld [vmem:[#allocation15 + $0xa8] sm:$0xff]
    %v685 = vld [vmem:[#allocation15 + $0xb0] sm:$0xff]
    %v686 = vld [vmem:[#allocation15 + $0xb8] sm:$0xff]
    %v687 = vld [vmem:[#allocation15 + $0xc0] sm:$0xff]
    %v688 = vld [vmem:[#allocation15 + $0xc8] sm:$0xff]
    %v689 = vld [vmem:[#allocation15 + $0xd0] sm:$0xff]
    %v690 = vld [vmem:[#allocation15 + $0xd8] sm:$0xff]
    %v691 = vld [vmem:[#allocation15 + $0xe0] sm:$0xff]
    %v692 = vld [vmem:[#allocation15 + $0xe8] sm:$0xff]
    %v693 = vld [vmem:[#allocation15 + $0xf0] sm:$0xff]
    %v694 = vld [vmem:[#allocation15 + $0xf8] sm:$0xff]
    %v695 = vld [vmem:[#allocation15 + $0x100] sm:$0xff]
    %v696 = vld [vmem:[#allocation15 + $0x108] sm:$0xff]
    %v697 = vld [vmem:[#allocation15 + $0x110] sm:$0xff]
    %v698 = vld [vmem:[#allocation15 + $0x118] sm:$0xff]
    %v699 = vld [vmem:[#allocation15 + $0x120] sm:$0xff]
    %v700 = vld [vmem:[#allocation15 + $0x128] sm:$0xff]
    %v701 = vld [vmem:[#allocation15 + $0x130] sm:$0xff]
    %v702 = vld [vmem:[#allocation15 + $0x138] sm:$0xff]
    %v703 = vld [vmem:[#allocation15 + $0x140] sm:$0xff]
    %v704 = vld [vmem:[#allocation15 + $0x148] sm:$0xff]
    %v705 = vld [vmem:[#allocation15 + $0x150] sm:$0xff]
    %v706 = vld [vmem:[#allocation15 + $0x158] sm:$0xff]
    %v707 = vld [vmem:[#allocation15 + $0x160] sm:$0xff]
    %v708 = vld [vmem:[#allocation15 + $0x168] sm:$0xff]
    %v709 = vld [vmem:[#allocation15 + $0x170] sm:$0xff]
    %v710 = vld [vmem:[#allocation15 + $0x178] sm:$0xff]
    %v759 = vunpack.c.l.b16 %v663
    %v760 = vunpack.c.h.b16 %v663
    %v761 = vunpack.c.l.b16 %v664
    %v762 = vunpack.c.h.b16 %v664
    %v763 = vunpack.c.l.b16 %v665
    %v764 = vunpack.c.h.b16 %v665
    %v765 = vunpack.c.l.b16 %v666
    %v766 = vunpack.c.h.b16 %v666
    %v767 = vunpack.c.l.b16 %v667
    %v768 = vunpack.c.h.b16 %v667
    %v769 = vunpack.c.l.b16 %v668
    %v770 = vunpack.c.h.b16 %v668
    %v771 = vunpack.c.l.b16 %v669
    %v772 = vunpack.c.h.b16 %v669
    %v773 = vunpack.c.l.b16 %v670
    %v774 = vunpack.c.h.b16 %v670
    %v775 = vunpack.c.l.b16 %v671
    %v776 = vunpack.c.h.b16 %v671
    %v777 = vunpack.c.l.b16 %v672
    %v778 = vunpack.c.h.b16 %v672
    %v779 = vunpack.c.l.b16 %v673
    %v780 = vunpack.c.h.b16 %v673
    %v781 = vunpack.c.l.b16 %v674
    %v782 = vunpack.c.h.b16 %v674
    %v783 = vunpack.c.l.b16 %v675
    %v784 = vunpack.c.h.b16 %v675
    %v785 = vunpack.c.l.b16 %v676
    %v786 = vunpack.c.h.b16 %v676
    %v787 = vunpack.c.l.b16 %v677
    %v788 = vunpack.c.h.b16 %v677
    %v789 = vunpack.c.l.b16 %v678
    %v790 = vunpack.c.h.b16 %v678
    %v791 = vunpack.c.l.b16 %v679
    %v792 = vunpack.c.h.b16 %v679
    %v793 = vunpack.c.l.b16 %v680
    %v794 = vunpack.c.h.b16 %v680
    %v795 = vunpack.c.l.b16 %v681
    %v796 = vunpack.c.h.b16 %v681
    %v797 = vunpack.c.l.b16 %v682
    %v798 = vunpack.c.h.b16 %v682
    %v799 = vunpack.c.l.b16 %v683
    %v800 = vunpack.c.h.b16 %v683
    %v801 = vunpack.c.l.b16 %v684
    %v802 = vunpack.c.h.b16 %v684
    %v803 = vunpack.c.l.b16 %v685
    %v804 = vunpack.c.h.b16 %v685
    %v805 = vunpack.c.l.b16 %v686
    %v806 = vunpack.c.h.b16 %v686
    %v807 = vunpack.c.l.b16 %v687
    %v808 = vunpack.c.h.b16 %v687
    %v809 = vunpack.c.l.b16 %v688
    %v810 = vunpack.c.h.b16 %v688
    %v811 = vunpack.c.l.b16 %v689
    %v812 = vunpack.c.h.b16 %v689
    %v813 = vunpack.c.l.b16 %v690
    %v814 = vunpack.c.h.b16 %v690
    %v815 = vunpack.c.l.b16 %v691
    %v816 = vunpack.c.h.b16 %v691
    %v817 = vunpack.c.l.b16 %v692
    %v818 = vunpack.c.h.b16 %v692
    %v819 = vunpack.c.l.b16 %v693
    %v820 = vunpack.c.h.b16 %v693
    %v821 = vunpack.c.l.b16 %v694
    %v822 = vunpack.c.h.b16 %v694
    %v823 = vunpack.c.l.b16 %v695
    %v824 = vunpack.c.h.b16 %v695
    %v825 = vunpack.c.l.b16 %v696
    %v826 = vunpack.c.h.b16 %v696
    %v827 = vunpack.c.l.b16 %v697
    %v828 = vunpack.c.h.b16 %v697
    %v829 = vunpack.c.l.b16 %v698
    %v830 = vunpack.c.h.b16 %v698
    %v831 = vunpack.c.l.b16 %v699
    %v832 = vunpack.c.h.b16 %v699
    %v833 = vunpack.c.l.b16 %v700
    %v834 = vunpack.c.h.b16 %v700
    %v835 = vunpack.c.l.b16 %v701
    %v836 = vunpack.c.h.b16 %v701
    %v837 = vunpack.c.l.b16 %v702
    %v838 = vunpack.c.h.b16 %v702
    %v839 = vunpack.c.l.b16 %v703
    %v840 = vunpack.c.h.b16 %v703
    %v841 = vunpack.c.l.b16 %v704
    %v842 = vunpack.c.h.b16 %v704
    %v843 = vunpack.c.l.b16 %v705
    %v844 = vunpack.c.h.b16 %v705
    %v845 = vunpack.c.l.b16 %v706
    %v846 = vunpack.c.h.b16 %v706
    %v847 = vunpack.c.l.b16 %v707
    %v848 = vunpack.c.h.b16 %v707
    %v849 = vunpack.c.l.b16 %v708
    %v850 = vunpack.c.h.b16 %v708
    %v851 = vunpack.c.l.b16 %v709
    %v852 = vunpack.c.h.b16 %v709
    %v853 = vunpack.c.l.b16 %v710
    %v854 = vunpack.c.h.b16 %v710
    %v855 = vpack.c.b16 %v761, %v759
    %v856 = vpack.c.b16 %v762, %v760
    %v857 = vpack.c.b16 %v765, %v763
    %v858 = vpack.c.b16 %v766, %v764
    %v859 = vpack.c.b16 %v769, %v767
    %v860 = vpack.c.b16 %v770, %v768
    %v861 = vpack.c.b16 %v773, %v771
    %v862 = vpack.c.b16 %v774, %v772
    %v863 = vpack.c.b16 %v777, %v775
    %v864 = vpack.c.b16 %v778, %v776
    %v865 = vpack.c.b16 %v781, %v779
    %v866 = vpack.c.b16 %v782, %v780
    %v867 = vpack.c.b16 %v785, %v783
    %v868 = vpack.c.b16 %v786, %v784
    %v869 = vpack.c.b16 %v789, %v787
    %v870 = vpack.c.b16 %v790, %v788
    %v871 = vpack.c.b16 %v793, %v791
    %v872 = vpack.c.b16 %v794, %v792
    %v873 = vpack.c.b16 %v797, %v795
    %v874 = vpack.c.b16 %v798, %v796
    %v875 = vpack.c.b16 %v801, %v799
    %v876 = vpack.c.b16 %v802, %v800
    %v877 = vpack.c.b16 %v805, %v803
    %v878 = vpack.c.b16 %v806, %v804
    %v879 = vpack.c.b16 %v809, %v807
    %v880 = vpack.c.b16 %v810, %v808
    %v881 = vpack.c.b16 %v813, %v811
    %v882 = vpack.c.b16 %v814, %v812
    %v883 = vpack.c.b16 %v817, %v815
    %v884 = vpack.c.b16 %v818, %v816
    %v885 = vpack.c.b16 %v821, %v819
    %v886 = vpack.c.b16 %v822, %v820
    %v887 = vpack.c.b16 %v825, %v823
    %v888 = vpack.c.b16 %v826, %v824
    %v889 = vpack.c.b16 %v829, %v827
    %v890 = vpack.c.b16 %v830, %v828
    %v891 = vpack.c.b16 %v833, %v831
    %v892 = vpack.c.b16 %v834, %v832
    %v893 = vpack.c.b16 %v837, %v835
    %v894 = vpack.c.b16 %v838, %v836
    %v895 = vpack.c.b16 %v841, %v839
    %v896 = vpack.c.b16 %v842, %v840
    %v897 = vpack.c.b16 %v845, %v843
    %v898 = vpack.c.b16 %v846, %v844
    %v899 = vpack.c.b16 %v849, %v847
    %v900 = vpack.c.b16 %v850, %v848
    %v901 = vpack.c.b16 %v853, %v851
    %v902 = vpack.c.b16 %v854, %v852
    %951 = vmatprep.subr.bf16.mxu0 %v856
    %952 = vmatpush1.bf16.msra.mxu0 %v855
    %953 = vmatprep.subr.bf16.mxu0 %v858
    %954 = vmatpush1.bf16.msra.mxu0 %v857
    %955 = vmatprep.subr.bf16.mxu0 %v860
    %956 = vmatpush1.bf16.msra.mxu0 %v859
    %957 = vmatprep.subr.bf16.mxu0 %v862
    %958 = vmatpush1.bf16.msra.mxu0 %v861
    %959 = vmatprep.subr.bf16.mxu0 %v864
    %960 = vmatpush1.bf16.msra.mxu0 %v863
    %961 = vmatprep.subr.bf16.mxu0 %v866
    %962 = vmatpush1.bf16.msra.mxu0 %v865
    %963 = vmatprep.subr.bf16.mxu0 %v868
    %964 = vmatpush1.bf16.msra.mxu0 %v867
    %965 = vmatprep.subr.bf16.mxu0 %v870
    %966 = vmatpush1.bf16.msra.mxu0 %v869
    %967 = vmatprep.subr.bf16.mxu0 %v872
    %968 = vmatpush1.bf16.msra.mxu0 %v871
    %969 = vmatprep.subr.bf16.mxu0 %v874
    %970 = vmatpush1.bf16.msra.mxu0 %v873
    %971 = vmatprep.subr.bf16.mxu0 %v876
    %972 = vmatpush1.bf16.msra.mxu0 %v875
    %973 = vmatprep.subr.bf16.mxu0 %v878
    %974 = vmatpush1.bf16.msra.mxu0 %v877
    %975 = vmatprep.subr.bf16.mxu0 %v880
    %976 = vmatpush1.bf16.msra.mxu0 %v879
    %977 = vmatprep.subr.bf16.mxu0 %v882
    %978 = vmatpush1.bf16.msra.mxu0 %v881
    %979 = vmatprep.subr.bf16.mxu0 %v884
    %980 = vmatpush1.bf16.msra.mxu0 %v883
    %981 = vmatprep.subr.bf16.mxu0 %v886
    %982 = vmatpush1.bf16.msra.mxu0 %v885
    %983 = vmatprep.mubr.bf16.mxu0 %v661
    %984 = vmatmul.mubr.bf16.gmra.mrb[0].mxu0 %v660
    %v985 = vpop.f32.mrb[0].mxu0
    %v986 = vadd.f32 0.0, %v985
    %v987 = vpop.f32.mrb[0].mxu0
    %v988 = vadd.f32 0.0, %v987
    %v989 = vpop.f32.mrb[0].mxu0
    %v990 = vadd.f32 0.0, %v989
    %v991 = vpop.f32.mrb[0].mxu0
    %v992 = vadd.f32 0.0, %v991
    %993 = vdwg.mxu0
    %994 = vmatprep.subr.bf16.mxu0 %v888
    %995 = vmatpush1.bf16.msra.mxu0 %v887
    %996 = vmatprep.subr.bf16.mxu0 %v890
    %997 = vmatpush1.bf16.msra.mxu0 %v889
    %998 = vmatprep.subr.bf16.mxu0 %v892
    %999 = vmatpush1.bf16.msra.mxu0 %v891
    %1000 = vmatprep.subr.bf16.mxu0 %v894
    %1001 = vmatpush1.bf16.msra.mxu0 %v893
    %1002 = vmatprep.subr.bf16.mxu0 %v896
    %1003 = vmatpush1.bf16.msra.mxu0 %v895
    %1004 = vmatprep.subr.bf16.mxu0 %v898
    %1005 = vmatpush1.bf16.msra.mxu0 %v897
    %1006 = vmatprep.subr.bf16.mxu0 %v900
    %1007 = vmatpush1.bf16.msra.mxu0 %v899
    %1008 = vmatprep.subr.bf16.mxu0 %v902
    %1009 = vmatpush1.bf16.msra.mxu0 %v901
    %1010 = vmatprep.subr.bf16.mxu0 0
    %1011 = vmatpush1.bf16.msra.mxu0 0
    %1012 = vmatprep.subr.bf16.mxu0 0
    %1013 = vmatpush1.bf16.msra.mxu0 0
    %1014 = vmatprep.subr.bf16.mxu0 0
    %1015 = vmatpush1.bf16.msra.mxu0 0
    %1016 = vmatprep.subr.bf16.mxu0 0
    %1017 = vmatpush1.bf16.msra.mxu0 0
    %1018 = vmatprep.subr.bf16.mxu0 0
    %1019 = vmatpush1.bf16.msra.mxu0 0
    %1020 = vmatprep.subr.bf16.mxu0 0
    %1021 = vmatpush1.bf16.msra.mxu0 0
    %1022 = vmatprep.subr.bf16.mxu0 0
    %1023 = vmatpush1.bf16.msra.mxu0 0
    %1024 = vmatprep.subr.bf16.mxu0 0
    %1025 = vmatpush1.bf16.msra.mxu0 0
    %1026 = vmatprep.mubr.bf16.mxu0 0
    %1027 = vmatmul.mubr.bf16.gmra.mrb[0].mxu0 %v662
    %v1028 = vpop.f32.mrb[0].mxu0
    %v1029 = vadd.f32 %v986, %v1028
    %v1030 = vpop.f32.mrb[0].mxu0
    %v1031 = vadd.f32 %v988, %v1030
    %v1032 = vpop.f32.mrb[0].mxu0
    %v1033 = vadd.f32 %v990, %v1032
    %v1034 = vpop.f32.mrb[0].mxu0
    %v1035 = vadd.f32 %v992, %v1034
    %1036 = vdwg.mxu0
    %v1037 = vpack.c.bf16 %v1033, %v1029
    %v1038 = vld [vmem:[#allocation17] sm:$0x1]
    %v1039 = vpack.c.bf16 %v1038, %v1038
    %1040 = vmatprep.subr.bf16.mxu0 0
    %1041 = vmatpush1.bf16.xpose.msra.mxu0 %v1037
    %1042 = vmatprep.subr.bf16.mxu0 0
    %1043 = vmatpush1.bf16.xpose.msra.mxu0 0
    %1044 = vmatprep.subr.bf16.mxu0 0
    %1045 = vmatpush1.bf16.xpose.msra.mxu0 0
    %1046 = vmatprep.subr.bf16.mxu0 0
    %1047 = vmatpush1.bf16.xpose.msra.mxu0 0
    %1048 = vmatprep.subr.bf16.mxu0 0
    %1049 = vmatpush1.bf16.xpose.msra.mxu0 0
    %1050 = vmatprep.subr.bf16.mxu0 0
    %1051 = vmatpush1.bf16.xpose.msra.mxu0 0
    %1052 = vmatprep.subr.bf16.mxu0 0
    %1053 = vmatpush1.bf16.xpose.msra.mxu0 0
    %1054 = vmatprep.subr.bf16.mxu0 0
    %1055 = vmatpush1.bf16.xpose.msra.mxu0 0
    %1056 = vmatprep.subr.bf16.mxu0 0
    %1057 = vmatpush1.bf16.xpose.msra.mxu0 0
    %1058 = vmatprep.subr.bf16.mxu0 0
    %1059 = vmatpush1.bf16.xpose.msra.mxu0 0
    %1060 = vmatprep.subr.bf16.mxu0 0
    %1061 = vmatpush1.bf16.xpose.msra.mxu0 0
    %1062 = vmatprep.subr.bf16.mxu0 0
    %1063 = vmatpush1.bf16.xpose.msra.mxu0 0
    %1064 = vmatprep.subr.bf16.mxu0 0
    %1065 = vmatpush1.bf16.xpose.msra.mxu0 0
    %1066 = vmatprep.subr.bf16.mxu0 0
    %1067 = vmatpush1.bf16.xpose.msra.mxu0 0
    %1068 = vmatprep.subr.bf16.mxu0 0
    %1069 = vmatpush1.bf16.xpose.msra.mxu0 0
    %1070 = vmatprep.subr.bf16.mxu0 0
    %1071 = vmatpush1.bf16.xpose.msra.mxu0 0
    %1072 = vmatprep.mubr.bf16.mxu0 0
    %1073 = vmatmul.mubr.bf16.gmra.mrb[0].mxu0 %v1039
    %v1074 = vpop.f32.mrb[0].mxu0
    %v1075 = vadd.f32 0.0, %v1074
    %v1076 = vpop.f32.mrb[0].mxu0
    %v1077 = vpop.f32.mrb[0].mxu0
    %v1078 = vpop.f32.mrb[0].mxu0
    %1079 = vdwg.mxu0
    %v1080 = vld [vmem:[#allocation18] sm:$0x1]
    %v1082 = vlaneseq
    %v1083 = vshrl.u32 %v1082, 7
    %v1084 = vsub.s32 0, %v1083
    %v1085 = vrot.slane %v1080, %v1084
    %v1087 = vmul.f32 %v1029, %v1085
    %v1088 = vmul.f32 %v1033, %v1085
    %1089 = vadd.xlane.f32.xlu0 %v1087
    %v1090 = vpop.xlane.xlu0 %1089
    %1091 = vadd.xlane.f32.xlu0 %v1088
    %v1092 = vpop.xlane.xlu0 %1091
    %v1093 = vlaneseq
    %v1094 = vshrl.u32 %v1093, 7
    %v1095 = vsub.s32 0, %v1094
    %v1096 = vrot.slane %v1075, %v1095
    %v1097 = vadd.f32 %v1090, %v1096
    %v1098 = vadd.f32 %v1092, %v1096
    %vm1099 = vcmp.ge.f32.partialorder %v1097, 0.0
    %vm1100 = vcmp.ge.f32.partialorder %v1098, 0.0
    %v1101 = vmul.f32 %v1097, 0.2
    %v1102 = vmul.f32 %v1098, 0.2
    %v1103 = vsel %vm1099, %v1097, %v1101
    %v1104 = vsel %vm1100, %v1098, %v1102
    %v1105 = vld [vmem:[#allocation21] sm:$0xff]
    %v1106 = vld [vmem:[#allocation21 + $0x8] sm:$0xff]
    %vm1107 = vcmp.gt.f32.partialorder %v1105, 0.0
    %vm1108 = vcmp.gt.f32.partialorder %v1106, 0.0
    %v1109 = vsel %vm1107, %v1103, -1e+30
    %v1110 = vsel %vm1108, %v1104, -1e+30
    %v1111 = vsel %vm356, %v1109, -inf
    %1112 = vmax.xlane.f32.xlu0 %v1111
    %v1113 = vpop.xlane.xlu0 %1112
    %v1114 = vsel %vm356, %v1110, -inf
    %1115 = vmax.xlane.f32.xlu0 %v1114
    %v1116 = vpop.xlane.xlu0 %1115
    %v1117 = vsub.f32 %v1109, %v1113
    %v1118 = vsub.f32 %v1110, %v1116
    %v1119 = vmul.f32 %v1117, 1.442695
    %v1120 = vpow.pop %v1119
    %v1121 = vmul.f32 %v1118, 1.442695
    %v1122 = vpow.pop %v1121
    %v1123 = vsel %vm356, %v1120, 0.0
    %1124 = vadd.xlane.f32.xlu0 %v1123
    %v1125 = vpop.xlane.xlu0 %1124
    %v1126 = vsel %vm356, %v1122, 0.0
    %1127 = vadd.xlane.f32.xlu0 %v1126
    %v1128 = vpop.xlane.xlu0 %1127
    %v1129 = vrcp.pop %v1125
    %v1130 = vmul.f32 %v1120, %v1129
    %v1131 = vrcp.pop %v1128
    %v1132 = vmul.f32 %v1122, %v1131
    %v1133 = vpack.c.bf16 %v1132, %v1130
    %v1134 = vld [vmem:[#allocation20] sm:$0x1]
    %v1136 = vlaneseq
    %v1137 = vshrl.u32 %v1136, 7
    %v1138 = vsub.s32 0, %v1137
    %v1139 = vrot.slane %v1134, %v1138
    %v1142 = vsel %vm356, %v1133, 0
    %1144 = vmatprep.subr.bf16.mxu0 0
    %1145 = vmatpush1.bf16.msra.mxu0 %v1037
    %1146 = vmatprep.subr.bf16.mxu0 0
    %1147 = vmatpush1.bf16.msra.mxu0 0
    %1148 = vmatprep.subr.bf16.mxu0 0
    %1149 = vmatpush1.bf16.msra.mxu0 0
    %1150 = vmatprep.subr.bf16.mxu0 0
    %1151 = vmatpush1.bf16.msra.mxu0 0
    %1152 = vmatprep.subr.bf16.mxu0 0
    %1153 = vmatpush1.bf16.msra.mxu0 0
    %1154 = vmatprep.subr.bf16.mxu0 0
    %1155 = vmatpush1.bf16.msra.mxu0 0
    %1156 = vmatprep.subr.bf16.mxu0 0
    %1157 = vmatpush1.bf16.msra.mxu0 0
    %1158 = vmatprep.subr.bf16.mxu0 0
    %1159 = vmatpush1.bf16.msra.mxu0 0
    %1160 = vmatprep.subr.bf16.mxu0 0
    %1161 = vmatpush1.bf16.msra.mxu0 0
    %1162 = vmatprep.subr.bf16.mxu0 0
    %1163 = vmatpush1.bf16.msra.mxu0 0
    %1164 = vmatprep.subr.bf16.mxu0 0
    %1165 = vmatpush1.bf16.msra.mxu0 0
    %1166 = vmatprep.subr.bf16.mxu0 0
    %1167 = vmatpush1.bf16.msra.mxu0 0
    %1168 = vmatprep.subr.bf16.mxu0 0
    %1169 = vmatpush1.bf16.msra.mxu0 0
    %1170 = vmatprep.subr.bf16.mxu0 0
    %1171 = vmatpush1.bf16.msra.mxu0 0
    %1172 = vmatprep.subr.bf16.mxu0 0
    %1173 = vmatpush1.bf16.msra.mxu0 0
    %1174 = vmatprep.subr.bf16.mxu0 0
    %1175 = vmatpush1.bf16.msra.mxu0 0
    %1176 = vmatprep.mubr.bf16.mxu0 0
    %1177 = vmatmul.mubr.bf16.gmra.mrb[0].mxu0 %v1142
    %v1178 = vpop.f32.mrb[0].mxu0
    %v1179 = vadd.f32 %v1139, %v1178
    %v1180 = vpop.f32.mrb[0].mxu0
    %v1181 = vpop.f32.mrb[0].mxu0
    %v1182 = vadd.f32 %v1139, %v1181
    %v1183 = vpop.f32.mrb[0].mxu0
    %1184 = vdwg.mxu0
    %v1185 = vtanh.pop %v1179
    %v1186 = vtanh.pop %v1182
    %v1187 = vpack.c.bf16 %v1186, %v1185
    %v1188 = vld [vmem:[#allocation23] sm:$0xf]
    %v1189 = vld [vmem:[#allocation23 + $0x4] sm:$0xf]
    %v1190 = vld [vmem:[#allocation23 + $0x8] sm:$0xf]
    %v1191 = vld [vmem:[#allocation23 + $0xc] sm:$0xf]
    %v1192 = vld [vmem:[#allocation23 + $0x10] sm:$0xf]
    %v1193 = vld [vmem:[#allocation23 + $0x14] sm:$0xf]
    %v1194 = vld [vmem:[#allocation23 + $0x18] sm:$0xf]
    %v1195 = vld [vmem:[#allocation23 + $0x1c] sm:$0xf]
    %v1196 = vld [vmem:[#allocation23 + $0x20] sm:$0xf]
    %v1197 = vld [vmem:[#allocation23 + $0x24] sm:$0xf]
    %v1198 = vld [vmem:[#allocation23 + $0x28] sm:$0xf]
    %v1199 = vld [vmem:[#allocation23 + $0x2c] sm:$0xf]
    %v1200 = vld [vmem:[#allocation23 + $0x30] sm:$0xf]
    %v1201 = vld [vmem:[#allocation23 + $0x34] sm:$0xf]
    %v1202 = vld [vmem:[#allocation23 + $0x38] sm:$0xf]
    %v1203 = vld [vmem:[#allocation23 + $0x3c] sm:$0xf]
    %v1220 = vunpack.c.l.b16 %v1188
    %v1221 = vunpack.c.l.b16 %v1189
    %v1222 = vunpack.c.l.b16 %v1190
    %v1223 = vunpack.c.l.b16 %v1191
    %v1224 = vunpack.c.l.b16 %v1192
    %v1225 = vunpack.c.l.b16 %v1193
    %v1226 = vunpack.c.l.b16 %v1194
    %v1227 = vunpack.c.l.b16 %v1195
    %v1228 = vunpack.c.l.b16 %v1196
    %v1229 = vunpack.c.l.b16 %v1197
    %v1230 = vunpack.c.l.b16 %v1198
    %v1231 = vunpack.c.l.b16 %v1199
    %v1232 = vunpack.c.l.b16 %v1200
    %v1233 = vunpack.c.l.b16 %v1201
    %v1234 = vunpack.c.l.b16 %v1202
    %v1235 = vunpack.c.l.b16 %v1203
    %v1236 = vpack.c.b16 %v1221, %v1220
    %v1237 = vpack.c.b16 %v1223, %v1222
    %v1238 = vpack.c.b16 %v1225, %v1224
    %v1239 = vpack.c.b16 %v1227, %v1226
    %v1240 = vpack.c.b16 %v1229, %v1228
    %v1241 = vpack.c.b16 %v1231, %v1230
    %v1242 = vpack.c.b16 %v1233, %v1232
    %v1243 = vpack.c.b16 %v1235, %v1234
    %1252 = vmatprep.subr.bf16.mxu0 0
    %1253 = vmatpush1.bf16.msra.mxu0 %v1236
    %1254 = vmatprep.subr.bf16.mxu0 0
    %1255 = vmatpush1.bf16.msra.mxu0 %v1237
    %1256 = vmatprep.subr.bf16.mxu0 0
    %1257 = vmatpush1.bf16.msra.mxu0 %v1238
    %1258 = vmatprep.subr.bf16.mxu0 0
    %1259 = vmatpush1.bf16.msra.mxu0 %v1239
    %1260 = vmatprep.subr.bf16.mxu0 0
    %1261 = vmatpush1.bf16.msra.mxu0 %v1240
    %1262 = vmatprep.subr.bf16.mxu0 0
    %1263 = vmatpush1.bf16.msra.mxu0 %v1241
    %1264 = vmatprep.subr.bf16.mxu0 0
    %1265 = vmatpush1.bf16.msra.mxu0 %v1242
    %1266 = vmatprep.subr.bf16.mxu0 0
    %1267 = vmatpush1.bf16.msra.mxu0 %v1243
    %1268 = vmatprep.subr.bf16.mxu0 0
    %1269 = vmatpush1.bf16.msra.mxu0 0
    %1270 = vmatprep.subr.bf16.mxu0 0
    %1271 = vmatpush1.bf16.msra.mxu0 0
    %1272 = vmatprep.subr.bf16.mxu0 0
    %1273 = vmatpush1.bf16.msra.mxu0 0
    %1274 = vmatprep.subr.bf16.mxu0 0
    %1275 = vmatpush1.bf16.msra.mxu0 0
    %1276 = vmatprep.subr.bf16.mxu0 0
    %1277 = vmatpush1.bf16.msra.mxu0 0
    %1278 = vmatprep.subr.bf16.mxu0 0
    %1279 = vmatpush1.bf16.msra.mxu0 0
    %1280 = vmatprep.subr.bf16.mxu0 0
    %1281 = vmatpush1.bf16.msra.mxu0 0
    %1282 = vmatprep.subr.bf16.mxu0 0
    %1283 = vmatpush1.bf16.msra.mxu0 0
    %1284 = vmatprep.mubr.bf16.mxu0 0
    %1285 = vmatmul.mubr.bf16.gmra.mrb[0].mxu0 %v1187
    %v1286 = vpop.f32.mrb[0].mxu0
    %v1287 = vadd.f32 0.0, %v1286
    %v1288 = vpop.f32.mrb[0].mxu0
    %v1289 = vpop.f32.mrb[0].mxu0
    %v1290 = vadd.f32 0.0, %v1289
    %v1291 = vpop.f32.mrb[0].mxu0
    %1292 = vdwg.mxu0
    %v1293 = vadd.f32 %v1031, %v1287
    %v1294 = vadd.f32 %v1035, %v1290
    %v1295 = vld [vmem:[#allocation24] sm:$0x1]
    %v1297 = vlaneseq
    %v1298 = vshrl.u32 %v1297, 7
    %v1299 = vsub.s32 0, %v1298
    %v1300 = vrot.slane %v1295, %v1299
    %v1302 = vadd.f32 %v1293, %v1300
    %v1303 = vadd.f32 %v1294, %v1300
    %1304 = vst [vmem:[#allocation26] sm:$0xff] %v1302
    %1305 = vst [vmem:[#allocation26 + $0x8] sm:$0xff] %v1303
    // Predicated region
    $region114: #{tpu_custom_call.1} parent=1 // pred_check
      _
    $region115: #{tpu_custom_call.1} parent=1 // pred_check_branch
      %1307 = sbr.rel (0) target = $region117
    $region116: #{tpu_custom_call.1} parent=1 // pred_region
      %s1309 = ssub.s32 256, 256
      %1310 = vsyncadd [#allocation5], %s1309
      %s1311 = sshll.u32 [#allocation26], 4
      %s1312 = int_to_ptr.vmem [resolvable:$true] %s1311
      %1317 = dma.vmem_to_hbm [thread:$0]  %s1312, 256, %s14, [#allocation5], 128, 128, 8
    $region117: #{tpu_custom_call.1} parent=1 // pred_fallthru
      _
    // Predicated region
    $region118: #{tpu_custom_call.1} parent=1 // pred_check
      _
    $region119: #{tpu_custom_call.1} parent=1 // pred_check_branch
      %1319 = sbr.rel (0) target = $region121
    $region120: #{tpu_custom_call.1} parent=1 // pred_region
      %1320 = dma.done [#allocation5], 256
    $region121: #{tpu_custom_call.1} parent=1 // pred_fallthru
      _
    %1321 = vsyncpa [#allocation4], 1
    %1322 = vsyncpa [#allocation7], 1
    %1323 = vsyncpa [#allocation10], 1
    %1324 = vsyncpa [#allocation13], 1
    %1325 = vsyncpa [#allocation16], 1
    %1326 = vsyncpa [#allocation19], 1
    %1327 = vsyncpa [#allocation22], 1
    %1328 = vsyncpa [#allocation25], 1
    %1329 = vsyncpa [#allocation5], 1

</llo_original>
